<compile_context>
chip_gen: v6e
topology: v6e:2x2x1
jax: 0.10.0
libtpu: 0.0.40
codegen_flags: <defaults>
</compile_context>

<pallas_src>
import numpy as np
import jax
import jax.numpy as jnp
from jax.experimental import pallas as pl
from jax.experimental.pallas import tpu as pltpu


# ----------------------- phase 1: im2col + conv matmul + BN partials ------------------ #
def _conv_stats_kernel(x_ref, w_ref, conv_ref, ssum_ref, ssq_ref):
    # x_ref   : (1, 1, TH+4, W+4, Cin)  bf16 halo'd input strip (spatial pad = 2)
    # w_ref   : (Kp, Cp)                bf16 tap-major conv weights, zero-padded
    # conv_ref: (1, TH, W, Cout)        bf16 conv output (un-padded channels)
    # ssum_ref: (1, 1, 1, Cp)           f32 per-(batch, strip) sum over the strip
    # ssq_ref : (1, 1, 1, Cp)           f32 per-(batch, strip) sum of squares
    _, _, THp4, Wp4, Cin = x_ref.shape
    TH, W = THp4 - 4, Wp4 - 4
    Kp, Cp = w_ref.shape
    Cout = conv_ref.shape[-1]

    # Load the halo strip once; im2col is done in VMEM with 25 shifted static slices
    # concatenated on the lane axis (zero-padded up to Kp so the matmul is lane-aligned).
    xh = x_ref[...].reshape(THp4, Wp4, Cin)
    cols = [xh[kh:kh + TH, kw:kw + W, :] for kh in range(5) for kw in range(5)]
    pad_k = Kp - 25 * Cin
    if pad_k:
        cols.append(jnp.zeros((TH, W, pad_k), xh.dtype))
    patches = jnp.concatenate(cols, axis=-1).reshape(TH * W, Kp)   # (TH*W, Kp) bf16

    # Single bf16 MXU matmul with f32 accumulation (replaces 25 tiny per-tap matmuls).
    acc = jnp.dot(patches, w_ref[...], preferred_element_type=jnp.float32)  # (TH*W, Cp)

    # Per-strip BN partials; reduced over (N, strips) in the wrapper so both grid axes
    # stay "parallel" (v7x: shards across both TensorCores even when N is small/odd).
    ssum_ref[...] = jnp.sum(acc, axis=0).reshape(1, 1, 1, Cp)
    ssq_ref[...] = jnp.sum(acc * acc, axis=0).reshape(1, 1, 1, Cp)

    # Intermediate stored in bf16 with only the real Cout channels (masked vst is far
    # cheaper than writing/re-reading Cp-padded lanes in this mem-bound kernel).
    conv_ref[...] = acc[:, :Cout].astype(conv_ref.dtype).reshape(1, TH, W, Cout)


# ------------------------- phase 2: BN apply + ReLU + 2x2 avg pool -------------------- #
def _bn_relu_pool_kernel(conv_ref, scale_ref, shift_ref, out_ref):
    # conv_ref : (1, TH2, Wh, 2*C) bf16 — W pool pairs packed onto the lane axis
    # scale_ref: (1, 2*C) f32  gamma * rsqrt(var + eps), tiled x2 to match lane packing
    # shift_ref: (1, 2*C) f32  beta - mean * scale, tiled x2
    # out_ref  : (1, TH2//2, Wh, C) f32
    _, TH2, Wh, C2 = conv_ref.shape
    C = C2 // 2

    # f32 VPU math even though HBM storage is bf16 (v5e has no bf16 VALU path).
    v = conv_ref[...].reshape(TH2, Wh, C2).astype(jnp.float32)
    # One fused BN FMA + ReLU over the whole block (single broadcast of scale/shift).
    y = jnp.maximum(v * scale_ref[...] + shift_ref[...], 0.0)
    yw = y[..., :C] + y[..., C:]                      # W pair: contiguous lane slices
    y4 = yw.reshape(TH2 // 2, 2, Wh, C)               # H pool pairs on a major dim
    out_ref[...] = ((y4[:, 0] + y4[:, 1]) * 0.25).reshape(1, TH2 // 2, Wh, C)


# --------------------------------------- wrapper -------------------------------------- #
def _round_up(x, m):
    return (x + m - 1) // m * m


def _pick_strip(H, row_bytes, budget_bytes, even=False):
    """Largest divisor of H (optionally even) whose per-step footprint fits the budget."""
    divs = [d for d in range(1, H + 1) if H % d == 0 and (not even or d % 2 == 0)]
    fits = [d for d in divs if d * row_bytes <= budget_bytes]
    return max(fits) if fits else min(divs)


def conv_block_5x5(x_nchw, weight_oihw, gamma, beta, pool_size=(2, 2), pool_type='avg',
                   eps=1e-5):
    # TODO(synk): only pool_type='avg' (the forward() default) is implemented in-kernel;
    # the 'max' and 'avg+max' branches are not translated.
    assert pool_type == 'avg' and tuple(pool_size) == (2, 2)
    N, Cin, H, W = x_nchw.shape
    Cout = weight_oihw.shape[0]
    assert H % 2 == 0 and W % 2 == 0, "2x2 avg-pool path assumes even H and W"
    Hh, Wh = H // 2, W // 2

    K = 25 * Cin
    Kp = _round_up(K, 128)     # contraction dim (zero-padded in-kernel)
    Cp = _round_up(Cout, 128)  # matmul N-tile width (VMEM only; never stored to HBM)

    # NCHW -> NHWC bf16, conv spatial padding, then overlapping halo'd H-strips so the
    # kernel builds patches in VMEM (only a ~1x copy of the input vs the old 25x im2col).
    x_nhwc = jnp.transpose(x_nchw, (0, 2, 3, 1)).astype(jnp.bfloat16)
    x_pad = jnp.pad(x_nhwc, ((0, 0), (2, 2), (2, 2), (0, 0)))        # (N, H+4, W+4, Cin)

    # Per-TH-row VMEM footprint (double-buffered blocks + in-kernel temporaries); budget
    # sized to stay well inside v7x's 64 MiB physical VMEM, generous for v5e/v6e.
    row1 = (2 * (W + 4) * Cin * 2      # bf16 input strip, 2 buffers
            + 2 * W * Cout * 2         # bf16 conv-out block, 2 buffers
            + 2 * W * Kp * 2           # bf16 im2col patch block + concat temps
            + W * Cp * 4)              # f32 matmul accumulator
    TH = _pick_strip(H, row1, budget_bytes=20 << 20)
    S = H // TH

    if S == 1:
        x_strips = x_pad[:, None]                                    # (N, 1, H+4, W+4, Cin)
    else:
        x_strips = jnp.stack(
            [x_pad[:, s * TH:s * TH + TH + 4] for s in range(S)], axis=1)

    # (Cout, Cin, 5, 5) -> tap-major (25*Cin, Cout), zero-padded to (Kp, Cp), bf16.
    # Padded output channels have zero weights -> zero stats; they are never stored.
    w_k = jnp.transpose(weight_oihw, (2, 3, 1, 0)).reshape(K, Cout)
    w_p = jnp.pad(w_k, ((0, Kp - K), (0, Cp - Cout))).astype(jnp.bfloat16)

    # ---- phase 1: conv matmul + per-strip BN statistics ------------------------------ #
    conv_i, ssum, ssq = pl.pallas_call(
        _conv_stats_kernel,
        out_shape=(jax.ShapeDtypeStruct((N, H, W, Cout), jnp.bfloat16),
                   jax.ShapeDtypeStruct((N, S, 1, Cp), jnp.float32),
                   jax.ShapeDtypeStruct((N, S, 1, Cp), jnp.float32)),
        grid_spec=pltpu.PrefetchScalarGridSpec(
            num_scalar_prefetch=0,
            grid=(N, S),
            in_specs=[pl.BlockSpec((1, 1, TH + 4, W + 4, Cin),
                                   lambda n, s: (n, s, 0, 0, 0)),
                      pl.BlockSpec((Kp, Cp), lambda n, s: (0, 0))],
            out_specs=(pl.BlockSpec((1, TH, W, Cout), lambda n, s: (n, s, 0, 0)),
                       pl.BlockSpec((1, 1, 1, Cp), lambda n, s: (n, s, 0, 0)),
                       pl.BlockSpec((1, 1, 1, Cp), lambda n, s: (n, s, 0, 0)))),
        compiler_params=pltpu.CompilerParams(
            dimension_semantics=("parallel", "parallel"),
            vmem_limit_bytes=48 * 1024 * 1024),
    )(x_strips, w_p)

    # Tiny reduction over (N, strips) + fused BN scale/shift (training-mode batch stats).
    cnt = jnp.float32(N * H * W)
    mean = jnp.sum(ssum, axis=(0, 1))[0, :Cout] / cnt
    var = jnp.sum(ssq, axis=(0, 1))[0, :Cout] / cnt - mean * mean
    var = jnp.maximum(var, 0.0)          # guard E[x^2] - E[x]^2 cancellation
    scale = gamma.astype(jnp.float32) * jax.lax.rsqrt(var + eps)
    shift = beta.astype(jnp.float32) - mean * scale

    # Lane-pack the W pool pair: (N,H,W,C) -> (N,H,Wh,2C) is a contiguous (free) reshape;
    # tile scale/shift x2 so a single FMA covers both packed columns.
    conv_r = conv_i.reshape(N, H, Wh, 2 * Cout)
    scale2 = jnp.tile(scale, 2).reshape(1, 2 * Cout)
    shift2 = jnp.tile(shift, 2).reshape(1, 2 * Cout)

    row2 = (2 * Wh * 2 * Cout * 2      # bf16 input block, 2 buffers
            + Wh * Cout * 4            # f32 output block (1 out row per 2 in rows, 2 bufs)
            + 3 * Wh * 2 * Cout * 4)   # f32 temporaries
    TH2 = _pick_strip(H, row2, budget_bytes=16 << 20, even=True)

    # ---- phase 2: fused BN apply + ReLU + 2x2 avg pool (H-tiled for VMEM/pipelining) -- #
    out_p = pl.pallas_call(
        _bn_relu_pool_kernel,
        out_shape=jax.ShapeDtypeStruct((N, Hh, Wh, Cout), jnp.float32),
        grid_spec=pltpu.PrefetchScalarGridSpec(
            num_scalar_prefetch=0,
            grid=(N, H // TH2),
            in_specs=[pl.BlockSpec((1, TH2, Wh, 2 * Cout), lambda n, s: (n, s, 0, 0)),
                      pl.BlockSpec((1, 2 * Cout), lambda n, s: (0, 0)),
                      pl.BlockSpec((1, 2 * Cout), lambda n, s: (0, 0))],
            out_specs=pl.BlockSpec((1, TH2 // 2, Wh, Cout), lambda n, s: (n, s, 0, 0))),
        compiler_params=pltpu.CompilerParams(
            dimension_semantics=("parallel", "parallel"),
            vmem_limit_bytes=48 * 1024 * 1024),
    )(conv_r, scale2, shift2)

    # Return NCHW like the PyTorch module.
    return jnp.transpose(out_p, (0, 3, 1, 2))


# -------------------------------------- reference ------------------------------------- #
def reference_jax(x_nchw, weight_oihw, gamma, beta):
    """Pure-JAX f32 reference matching the PyTorch forward (training-mode BN, avg pool)."""
    conv = jax.lax.conv_general_dilated(
        x_nchw, weight_oihw, window_strides=(1, 1), padding=((2, 2), (2, 2)),
        dimension_numbers=('NCHW', 'OIHW', 'NCHW'))
    mean = conv.mean(axis=(0, 2, 3), keepdims=True)
    var = ((conv - mean) ** 2).mean(axis=(0, 2, 3), keepdims=True)
    y = (conv - mean) / jnp.sqrt(var + 1e-5)
    y = y * gamma.reshape(1, -1, 1, 1) + beta.reshape(1, -1, 1, 1)
    y = jnp.maximum(y, 0.0)
    N, C, H, W = y.shape
    return y.reshape(N, C, H // 2, 2, W // 2, 2).mean(axis=(3, 5))


if __name__ == "__main__":
    key = jax.random.PRNGKey(0)
    N, Cin, Cout, H, W = 2, 4, 8, 16, 16

    kx, kw = jax.random.split(key)
    x = jax.random.normal(kx, (N, Cin, H, W), dtype=jnp.float32)

    # Xavier-uniform init of conv1.weight (bias=False), matching init_layer().
    fan_in, fan_out = Cin * 5 * 5, Cout * 5 * 5
    bound = float(np.sqrt(6.0 / (fan_in + fan_out)))
    weight = jax.random.uniform(kw, (Cout, Cin, 5, 5), jnp.float32, -bound, bound)

    # init_bn(): BN weight = 1, bias = 0.
    gamma = jnp.ones((Cout,), jnp.float32)
    beta = jnp.zeros((Cout,), jnp.float32)

    out = conv_block_5x5(x, weight, gamma, beta, pool_size=(2, 2), pool_type='avg')
    out = jax.block_until_ready(out)

    ref = jax.block_until_ready(reference_jax(x, weight, gamma, beta))
    assert out.shape == (N, Cout, H // 2, W // 2)
    # Tolerance loosened for the deliberate bf16 MXU operands / bf16 intermediate.
    np.testing.assert_allclose(np.asarray(out), np.asarray(ref), rtol=3e-2, atol=3e-2)

    print("KERNEL_OK")
</pallas_src>

<mosaic_0001>
module attributes {stable_mosaic.version = 11 : i64} {
  func.func @_conv_stats_kernel(%arg0: i32, %arg1: i32, %arg2: memref<1x1x20x20x4xbf16, #tpu.memory_space<vmem>>, %arg3: memref<128x128xbf16, #tpu.memory_space<vmem>>, %arg4: memref<1x16x16x8xbf16, #tpu.memory_space<vmem>>, %arg5: memref<1x1x1x128xf32, #tpu.memory_space<vmem>>, %arg6: memref<1x1x1x128xf32, #tpu.memory_space<vmem>>) attributes {dimension_semantics = [#tpu.dimension_semantics<parallel>, #tpu.dimension_semantics<parallel>], iteration_bounds = array<i64: 2, 1>, scalar_prefetch = 0 : i64, scratch_operands = 0 : i64, tpu.core_type = #tpu.core_type<tc>, window_params = [{transform_indices = @transform_0, window_bounds = array<i64: 1, 1, 20, 20, 4>}, {pipeline_mode = #tpu.pipeline_mode<synchronous>, transform_indices = @transform_1, window_bounds = array<i64: 128, 128>}, {transform_indices = @transform_2, window_bounds = array<i64: 1, 16, 16, 8>}, {transform_indices = @transform_3, window_bounds = array<i64: 1, 1, 1, 128>}, {transform_indices = @transform_4, window_bounds = array<i64: 1, 1, 1, 128>}]} {
    %c0 = arith.constant 0 : index
    %c0_0 = arith.constant 0 : index
    %c0_1 = arith.constant 0 : index
    %c0_2 = arith.constant 0 : index
    %c0_3 = arith.constant 0 : index
    %0 = vector.load %arg2[%c0, %c0_0, %c0_1, %c0_2, %c0_3] : memref<1x1x20x20x4xbf16, #tpu.memory_space<vmem>>, vector<1x1x20x20x4xbf16>
    %1 = vector.shape_cast %0 : vector<1x1x20x20x4xbf16> to vector<20x20x4xbf16>
    %2 = vector.extract_strided_slice %1 {offsets = [0, 0, 0], sizes = [16, 16, 4], strides = [1, 1, 1]} : vector<20x20x4xbf16> to vector<16x16x4xbf16>
    %3 = vector.extract_strided_slice %1 {offsets = [0, 1, 0], sizes = [16, 16, 4], strides = [1, 1, 1]} : vector<20x20x4xbf16> to vector<16x16x4xbf16>
    %4 = vector.extract_strided_slice %1 {offsets = [0, 2, 0], sizes = [16, 16, 4], strides = [1, 1, 1]} : vector<20x20x4xbf16> to vector<16x16x4xbf16>
    %5 = vector.extract_strided_slice %1 {offsets = [0, 3, 0], sizes = [16, 16, 4], strides = [1, 1, 1]} : vector<20x20x4xbf16> to vector<16x16x4xbf16>
    %6 = vector.extract_strided_slice %1 {offsets = [0, 4, 0], sizes = [16, 16, 4], strides = [1, 1, 1]} : vector<20x20x4xbf16> to vector<16x16x4xbf16>
    %7 = vector.extract_strided_slice %1 {offsets = [1, 0, 0], sizes = [16, 16, 4], strides = [1, 1, 1]} : vector<20x20x4xbf16> to vector<16x16x4xbf16>
    %8 = vector.extract_strided_slice %1 {offsets = [1, 1, 0], sizes = [16, 16, 4], strides = [1, 1, 1]} : vector<20x20x4xbf16> to vector<16x16x4xbf16>
    %9 = vector.extract_strided_slice %1 {offsets = [1, 2, 0], sizes = [16, 16, 4], strides = [1, 1, 1]} : vector<20x20x4xbf16> to vector<16x16x4xbf16>
    %10 = vector.extract_strided_slice %1 {offsets = [1, 3, 0], sizes = [16, 16, 4], strides = [1, 1, 1]} : vector<20x20x4xbf16> to vector<16x16x4xbf16>
    %11 = vector.extract_strided_slice %1 {offsets = [1, 4, 0], sizes = [16, 16, 4], strides = [1, 1, 1]} : vector<20x20x4xbf16> to vector<16x16x4xbf16>
    %12 = vector.extract_strided_slice %1 {offsets = [2, 0, 0], sizes = [16, 16, 4], strides = [1, 1, 1]} : vector<20x20x4xbf16> to vector<16x16x4xbf16>
    %13 = vector.extract_strided_slice %1 {offsets = [2, 1, 0], sizes = [16, 16, 4], strides = [1, 1, 1]} : vector<20x20x4xbf16> to vector<16x16x4xbf16>
    %14 = vector.extract_strided_slice %1 {offsets = [2, 2, 0], sizes = [16, 16, 4], strides = [1, 1, 1]} : vector<20x20x4xbf16> to vector<16x16x4xbf16>
    %15 = vector.extract_strided_slice %1 {offsets = [2, 3, 0], sizes = [16, 16, 4], strides = [1, 1, 1]} : vector<20x20x4xbf16> to vector<16x16x4xbf16>
    %16 = vector.extract_strided_slice %1 {offsets = [2, 4, 0], sizes = [16, 16, 4], strides = [1, 1, 1]} : vector<20x20x4xbf16> to vector<16x16x4xbf16>
    %17 = vector.extract_strided_slice %1 {offsets = [3, 0, 0], sizes = [16, 16, 4], strides = [1, 1, 1]} : vector<20x20x4xbf16> to vector<16x16x4xbf16>
    %18 = vector.extract_strided_slice %1 {offsets = [3, 1, 0], sizes = [16, 16, 4], strides = [1, 1, 1]} : vector<20x20x4xbf16> to vector<16x16x4xbf16>
    %19 = vector.extract_strided_slice %1 {offsets = [3, 2, 0], sizes = [16, 16, 4], strides = [1, 1, 1]} : vector<20x20x4xbf16> to vector<16x16x4xbf16>
    %20 = vector.extract_strided_slice %1 {offsets = [3, 3, 0], sizes = [16, 16, 4], strides = [1, 1, 1]} : vector<20x20x4xbf16> to vector<16x16x4xbf16>
    %21 = vector.extract_strided_slice %1 {offsets = [3, 4, 0], sizes = [16, 16, 4], strides = [1, 1, 1]} : vector<20x20x4xbf16> to vector<16x16x4xbf16>
    %22 = vector.extract_strided_slice %1 {offsets = [4, 0, 0], sizes = [16, 16, 4], strides = [1, 1, 1]} : vector<20x20x4xbf16> to vector<16x16x4xbf16>
    %23 = vector.extract_strided_slice %1 {offsets = [4, 1, 0], sizes = [16, 16, 4], strides = [1, 1, 1]} : vector<20x20x4xbf16> to vector<16x16x4xbf16>
    %24 = vector.extract_strided_slice %1 {offsets = [4, 2, 0], sizes = [16, 16, 4], strides = [1, 1, 1]} : vector<20x20x4xbf16> to vector<16x16x4xbf16>
    %25 = vector.extract_strided_slice %1 {offsets = [4, 3, 0], sizes = [16, 16, 4], strides = [1, 1, 1]} : vector<20x20x4xbf16> to vector<16x16x4xbf16>
    %26 = vector.extract_strided_slice %1 {offsets = [4, 4, 0], sizes = [16, 16, 4], strides = [1, 1, 1]} : vector<20x20x4xbf16> to vector<16x16x4xbf16>
    %cst = arith.constant 0.000000e+00 : bf16
    %27 = vector.broadcast %cst : bf16 to vector<16x16x28xbf16>
    %28 = tpu.concatenate %2, %3, %4, %5, %6, %7, %8, %9, %10, %11, %12, %13, %14, %15, %16, %17 in 2 : vector<16x16x4xbf16>, vector<16x16x4xbf16>, vector<16x16x4xbf16>, vector<16x16x4xbf16>, vector<16x16x4xbf16>, vector<16x16x4xbf16>, vector<16x16x4xbf16>, vector<16x16x4xbf16>, vector<16x16x4xbf16>, vector<16x16x4xbf16>, vector<16x16x4xbf16>, vector<16x16x4xbf16>, vector<16x16x4xbf16>, vector<16x16x4xbf16>, vector<16x16x4xbf16>, vector<16x16x4xbf16> -> vector<16x16x64xbf16>
    %29 = tpu.concatenate %18, %19, %20, %21, %22, %23, %24, %25, %26, %27 in 2 : vector<16x16x4xbf16>, vector<16x16x4xbf16>, vector<16x16x4xbf16>, vector<16x16x4xbf16>, vector<16x16x4xbf16>, vector<16x16x4xbf16>, vector<16x16x4xbf16>, vector<16x16x4xbf16>, vector<16x16x4xbf16>, vector<16x16x28xbf16> -> vector<16x16x64xbf16>
    %30 = tpu.concatenate %28, %29 in 2 : vector<16x16x64xbf16>, vector<16x16x64xbf16> -> vector<16x16x128xbf16>
    %31 = vector.shape_cast %30 : vector<16x16x128xbf16> to vector<256x128xbf16>
    %c0_4 = arith.constant 0 : index
    %c0_5 = arith.constant 0 : index
    %32 = vector.load %arg3[%c0_4, %c0_5] : memref<128x128xbf16, #tpu.memory_space<vmem>>, vector<128x128xbf16>
    %cst_6 = arith.constant dense<0.000000e+00> : vector<256x128xf32>
    %33 = tpu.matmul %31, %32, %cst_6 {dimension_numbers = #tpu.dot_dimension_numbers<[1], [0], [0], [1], [0, 0, 1, 1], [], []>} : vector<256x128xbf16>, vector<128x128xbf16>, vector<256x128xf32> -> vector<256x128xf32>
    %cst_7 = arith.constant dense<0.000000e+00> : vector<128xf32>
    %34 = vector.multi_reduction <add>, %33, %cst_7 [0] : vector<256x128xf32> to vector<128xf32>
    %35 = vector.shape_cast %34 : vector<128xf32> to vector<1x1x1x128xf32>
    %c0_8 = arith.constant 0 : index
    %c0_9 = arith.constant 0 : index
    %c0_10 = arith.constant 0 : index
    %c0_11 = arith.constant 0 : index
    %36 = vector.load %arg5[%c0_8, %c0_9, %c0_10, %c0_11] : memref<1x1x1x128xf32, #tpu.memory_space<vmem>>, vector<1x1x1x128xf32>
    tpu.vector_store %arg5[%c0_8, %c0_9, %c0_10, %c0_11], %35 {strides = array<i32>} : memref<1x1x1x128xf32, #tpu.memory_space<vmem>>, vector<1x1x1x128xf32>,
    %37 = arith.mulf %33, %33 : vector<256x128xf32>
    %cst_12 = arith.constant dense<0.000000e+00> : vector<128xf32>
    %38 = vector.multi_reduction <add>, %37, %cst_12 [0] : vector<256x128xf32> to vector<128xf32>
    %39 = vector.shape_cast %38 : vector<128xf32> to vector<1x1x1x128xf32>
    %c0_13 = arith.constant 0 : index
    %c0_14 = arith.constant 0 : index
    %c0_15 = arith.constant 0 : index
    %c0_16 = arith.constant 0 : index
    %40 = vector.load %arg6[%c0_13, %c0_14, %c0_15, %c0_16] : memref<1x1x1x128xf32, #tpu.memory_space<vmem>>, vector<1x1x1x128xf32>
    tpu.vector_store %arg6[%c0_13, %c0_14, %c0_15, %c0_16], %39 {strides = array<i32>} : memref<1x1x1x128xf32, #tpu.memory_space<vmem>>, vector<1x1x1x128xf32>,
    %41 = vector.extract_strided_slice %33 {offsets = [0, 0], sizes = [256, 8], strides = [1, 1]} : vector<256x128xf32> to vector<256x8xf32>
    %42 = arith.truncf %41 : vector<256x8xf32> to vector<256x8xbf16>
    %43 = vector.shape_cast %42 : vector<256x8xbf16> to vector<1x16x16x8xbf16>
    %c0_17 = arith.constant 0 : index
    %c0_18 = arith.constant 0 : index
    %c0_19 = arith.constant 0 : index
    %c0_20 = arith.constant 0 : index
    %44 = vector.load %arg4[%c0_17, %c0_18, %c0_19, %c0_20] : memref<1x16x16x8xbf16, #tpu.memory_space<vmem>>, vector<1x16x16x8xbf16>
    tpu.vector_store %arg4[%c0_17, %c0_18, %c0_19, %c0_20], %43 {strides = array<i32>} : memref<1x16x16x8xbf16, #tpu.memory_space<vmem>>, vector<1x16x16x8xbf16>,
    return
  }
  func.func @transform_0(%arg0: i32, %arg1: i32) -> (i32, i32, i32, i32, i32) {
    %c0_i32 = arith.constant 0 : i32
    %c0_i32_0 = arith.constant 0 : i32
    %c0_i32_1 = arith.constant 0 : i32
    %c0_i32_2 = arith.constant 0 : i32
    return %arg0, %arg1, %c0_i32, %c0_i32_0, %c0_i32_1 : i32, i32, i32, i32, i32
  }
  func.func @transform_1(%arg0: i32, %arg1: i32) -> (i32, i32) {
    %c0_i32 = arith.constant 0 : i32
    %c0_i32_0 = arith.constant 0 : i32
    %c0_i32_1 = arith.constant 0 : i32
    return %c0_i32, %c0_i32_0 : i32, i32
  }
  func.func @transform_2(%arg0: i32, %arg1: i32) -> (i32, i32, i32, i32) {
    %c0_i32 = arith.constant 0 : i32
    %c0_i32_0 = arith.constant 0 : i32
    %c0_i32_1 = arith.constant 0 : i32
    return %arg0, %arg1, %c0_i32, %c0_i32_0 : i32, i32, i32, i32
  }
  func.func @transform_3(%arg0: i32, %arg1: i32) -> (i32, i32, i32, i32) {
    %c0_i32 = arith.constant 0 : i32
    %c0_i32_0 = arith.constant 0 : i32
    %c0_i32_1 = arith.constant 0 : i32
    return %arg0, %arg1, %c0_i32, %c0_i32_0 : i32, i32, i32, i32
  }
  func.func @transform_4(%arg0: i32, %arg1: i32) -> (i32, i32, i32, i32) {
    %c0_i32 = arith.constant 0 : i32
    %c0_i32_0 = arith.constant 0 : i32
    %c0_i32_1 = arith.constant 0 : i32
    return %arg0, %arg1, %c0_i32, %c0_i32_0 : i32, i32, i32, i32
  }
}

</mosaic_0001>

<llo_original>
// kernel: tpu_custom_call.1
$region0: #{tpu_custom_call.1}
  #allocation0 [shape = 'u32[]', space=smem, size = 0x4, offset = 0x4, fixed_abs, tag = 'smem constant byte address 0x4 - core index']
  #allocation1 [shape = 'u32[144,128]{1,0:T(1,128)}', space=vmem, size = 0x12000, scoped, tag = 'internal scratch']
  %s0 = inlined_call_operand.vmem [shape: bf16[2,1,20,20,4], index: 0, kind: input, shape index: {}]
  %s1 = inlined_call_operand.vmem [shape: bf16[128,128], index: 1, kind: input, shape index: {}]
  %s2 = inlined_call_operand.vmem [shape: bf16[2,16,16,8], index: 2, kind: output, shape index: {0}]
  %s3 = inlined_call_operand.hbm [shape: f32[2,1,1,128], index: 3, kind: output, shape index: {1}]
  %s4 = inlined_call_operand.hbm [shape: f32[2,1,1,128], index: 4, kind: output, shape index: {2}]
  %5 = xla_tuple %s2, %s3, %s4
  %s6 = sld [smem:[#allocation0]]
  $region57: #{tpu_custom_call.1} parent=0
    _
  %s8 = ssub.s32 1, %s6
  %s9 = scalar_select 0, %s8, %s6
  $region1: #{tpu_custom_call.1} parent=0
    #allocation2 [shape = 'u8[1024]{0}', space=vmem, size = 0x400, scoped, tag = 'output window, operand 1']
    #allocation3 [shape = 's32[2]{0}', space=sflag, size = 0x8, scoped, tag = 'scoped memory for tpu_custom_call.1']
    #allocation4 [shape = 'u8[1024]{0}', space=vmem, size = 0x400, scoped, tag = 'output window, operand 2']
    #allocation5 [shape = 's32[2]{0}', space=sflag, size = 0x8, scoped, tag = 'scoped memory for tpu_custom_call.1']
    %10 = vsyncpa [#allocation3], 0
    %s11 = scalar_lea.sflag [#allocation3], 1
    %12 = vsyncpa %s11, 0
    %13 = vsyncpa [#allocation5], 0
    %s14 = scalar_lea.sflag [#allocation5], 1
    %15 = vsyncpa %s14, 0
    loop: start=0, step=1, limit=4
    $region2: #{tpu_custom_call.1} parent=1 // loop_pre_header
      _
    $region3: #{tpu_custom_call.1} parent=1 // loop_header
      %s17 = sphi 0, %s21
      %p18 = scmp.ge.s32.totalorder %s17, 4
      %s24 = sphi 0, %s36
      %s25 = sphi 0, %s32
      %s26 = sphi 0, %s24
      %s27 = sphi 0, %s25
      %s28 = sphi 0, %s26
      %s29 = sphi 0, %s27
      %s41 = sphi 0, %s43
      %s44 = sphi 0, %s41
      %s45 = sphi 0, %s44
      %s61 = sphi 0, %s45
      %s65 = sphi 0, %s65
      %s67 = sphi 0, %s65
      %s68 = sphi 0, %s67
      %s82 = sphi 0, %s68
      %s90 = sphi 0, %s92
      %s93 = sphi 0, %s90
      %s94 = sphi 0, %s93
      %s110 = sphi 0, %s94
      %s118 = sphi 0, %s120
      %s121 = sphi 0, %s118
      %s122 = sphi 0, %s121
      %s138 = sphi 0, %s122
      %s146 = sphi 0, %s148
      %s149 = sphi 0, %s146
      %s150 = sphi 0, %s149
      %s166 = sphi 0, %s150
    $region4: #{tpu_custom_call.1} parent=1 // loop_header_branch
      %20 = sbr.rel (%p18) target = $region8
    $region5: #{tpu_custom_call.1} parent=1 // loop_body
      %s22 = ssub.s32 %s17, 1
      %s23 = ssub.s32 %s17, 2
      %s30 = sadd.s32 1, %s25
      %p31 = scmp.ge.s32.totalorder %s30, 1
      %s32 = scalar_select %p31, 0, %s30
      %s33 = sadd.s32 1, %s24
      %s34 = scalar_select %p31, %s33, %s24
      %p35 = scmp.ge.s32.totalorder %s34, 2
      %s36 = scalar_select %p35, 0, %s34
      %s37 = ssub.s32 %s24, %s36
      %s38 = ssub.s32 %s25, %s32
      %s39 = sor.u32 %s37, %s38
      %p40 = scmp.eq.s32.totalorder %s39, 0
      %s42 = sadd.s32 %s41, 1
      %s43 = scalar_select %p40, %s41, %s42
      %p46 = pneg %p40
      %p47 = scmp.eq.s32.totalorder %s17, 1
      %p48 = por %p46, %p47
      %p49 = scmp.ne.s32.totalorder %s41, %s44
      %p50 = scmp.eq.s32.totalorder %s17, 0
      %p51 = por %p49, %p50
      %p52 = scmp.ne.s32.totalorder %s41, %s44
      %p53 = scmp.eq.s32.totalorder %s22, 1
      %p54 = por %p52, %p53
      %p55 = scmp.ne.s32.totalorder %s44, %s45
      %p56 = scmp.eq.s32.totalorder %s22, 0
      %p57 = por %p55, %p56
      %p58 = scmp.ne.s32.totalorder %s44, %s45
      %p59 = scmp.eq.s32.totalorder %s23, 1
      %p60 = por %p58, %p59
      %p62 = scmp.ne.s32.totalorder %s45, %s61
      %p63 = scmp.eq.s32.totalorder %s23, 0
      %p64 = por %p62, %p63
      %s66 = sadd.s32 %s65, 1
      %p69 = scmp.eq.s32.totalorder %s17, 1
      %p70 = scmp.ne.s32.totalorder %s65, %s67
      %p71 = scmp.eq.s32.totalorder %s17, 0
      %p72 = por %p70, %p71
      %p73 = scmp.ne.s32.totalorder %s65, %s67
      %p74 = scmp.eq.s32.totalorder %s22, 1
      %p75 = por %p73, %p74
      %p76 = scmp.ne.s32.totalorder %s67, %s68
      %p77 = scmp.eq.s32.totalorder %s22, 0
      %p78 = por %p76, %p77
      %p79 = scmp.ne.s32.totalorder %s67, %s68
      %p80 = scmp.eq.s32.totalorder %s23, 1
      %p81 = por %p79, %p80
      %p83 = scmp.ne.s32.totalorder %s68, %s82
      %p84 = scmp.eq.s32.totalorder %s23, 0
      %p85 = por %p83, %p84
      %s86 = ssub.s32 %s24, %s36
      %s87 = ssub.s32 %s25, %s32
      %s88 = sor.u32 %s86, %s87
      %p89 = scmp.eq.s32.totalorder %s88, 0
      %s91 = sadd.s32 %s90, 1
      %s92 = scalar_select %p89, %s90, %s91
      %p95 = pneg %p89
      %p96 = scmp.eq.s32.totalorder %s17, 1
      %p97 = por %p95, %p96
      %p98 = scmp.ne.s32.totalorder %s90, %s93
      %p99 = scmp.eq.s32.totalorder %s17, 0
      %p100 = por %p98, %p99
      %p101 = scmp.ne.s32.totalorder %s90, %s93
      %p102 = scmp.eq.s32.totalorder %s22, 1
      %p103 = por %p101, %p102
      %p104 = scmp.ne.s32.totalorder %s93, %s94
      %p105 = scmp.eq.s32.totalorder %s22, 0
      %p106 = por %p104, %p105
      %p107 = scmp.ne.s32.totalorder %s93, %s94
      %p108 = scmp.eq.s32.totalorder %s23, 1
      %p109 = por %p107, %p108
      %p111 = scmp.ne.s32.totalorder %s94, %s110
      %p112 = scmp.eq.s32.totalorder %s23, 0
      %p113 = por %p111, %p112
      %s114 = ssub.s32 %s24, %s36
      %s115 = ssub.s32 %s25, %s32
      %s116 = sor.u32 %s114, %s115
      %p117 = scmp.eq.s32.totalorder %s116, 0
      %s119 = sadd.s32 %s118, 1
      %s120 = scalar_select %p117, %s118, %s119
      %p123 = pneg %p117
      %p124 = scmp.eq.s32.totalorder %s17, 1
      %p125 = por %p123, %p124
      %p126 = scmp.ne.s32.totalorder %s118, %s121
      %p127 = scmp.eq.s32.totalorder %s17, 0
      %p128 = por %p126, %p127
      %p129 = scmp.ne.s32.totalorder %s118, %s121
      %p130 = scmp.eq.s32.totalorder %s22, 1
      %p131 = por %p129, %p130
      %p132 = scmp.ne.s32.totalorder %s121, %s122
      %p133 = scmp.eq.s32.totalorder %s22, 0
      %p134 = por %p132, %p133
      %p135 = scmp.ne.s32.totalorder %s121, %s122
      %p136 = scmp.eq.s32.totalorder %s23, 1
      %p137 = por %p135, %p136
      %p139 = scmp.ne.s32.totalorder %s122, %s138
      %p140 = scmp.eq.s32.totalorder %s23, 0
      %p141 = por %p139, %p140
      %s142 = ssub.s32 %s24, %s36
      %s143 = ssub.s32 %s25, %s32
      %s144 = sor.u32 %s142, %s143
      %p145 = scmp.eq.s32.totalorder %s144, 0
      %s147 = sadd.s32 %s146, 1
      %s148 = scalar_select %p145, %s146, %s147
      %p151 = pneg %p145
      %p152 = scmp.eq.s32.totalorder %s17, 1
      %p153 = por %p151, %p152
      %p154 = scmp.ne.s32.totalorder %s146, %s149
      %p155 = scmp.eq.s32.totalorder %s17, 0
      %p156 = por %p154, %p155
      %p157 = scmp.ne.s32.totalorder %s146, %s149
      %p158 = scmp.eq.s32.totalorder %s22, 1
      %p159 = por %p157, %p158
      %p160 = scmp.ne.s32.totalorder %s149, %s150
      %p161 = scmp.eq.s32.totalorder %s22, 0
      %p162 = por %p160, %p161
      %p163 = scmp.ne.s32.totalorder %s149, %s150
      %p164 = scmp.eq.s32.totalorder %s23, 1
      %p165 = por %p163, %p164
      %p167 = scmp.ne.s32.totalorder %s150, %s166
      %p168 = scmp.eq.s32.totalorder %s23, 0
      %p169 = por %p167, %p168
      %p170 = scmp.le.s32.totalorder 1, %s17
      %p171 = scmp.lt.s32.totalorder %s17, 3
      %p172 = pnand %p170, %p171
      %p173 = pneg %p172
      // Predicated region
      $region9: #{tpu_custom_call.1} parent=5 // pred_check
        _
      $region10: #{tpu_custom_call.1} parent=5 // pred_check_branch
        %175 = sbr.rel (%p172) target = $region12
      $region11: #{tpu_custom_call.1} parent=5 // pred_region
        %s176 = ssub.s32 %s17, 1
        // Predicated region
        $region13: #{tpu_custom_call.1} parent=11 // pred_check
          %p177 = pneg %p78
        $region14: #{tpu_custom_call.1} parent=11 // pred_check_branch
          %179 = sbr.rel (%p177) target = $region16
        $region15: #{tpu_custom_call.1} parent=11 // pred_region
          _
        $region16: #{tpu_custom_call.1} parent=11 // pred_fallthru
          _
      $region12: #{tpu_custom_call.1} parent=5 // pred_fallthru
        _
      %p180 = scmp.lt.s32.totalorder %s17, 2
      // Predicated region
      $region17: #{tpu_custom_call.1} parent=5 // pred_check
        %p181 = pneg %p180
      $region18: #{tpu_custom_call.1} parent=5 // pred_check_branch
        %183 = sbr.rel (%p181) target = $region20
      $region19: #{tpu_custom_call.1} parent=5 // pred_region
        // Predicated region
        $region21: #{tpu_custom_call.1} parent=19 // pred_check
          %p184 = pneg %p51
        $region22: #{tpu_custom_call.1} parent=19 // pred_check_branch
          %186 = sbr.rel (%p184) target = $region24
        $region23: #{tpu_custom_call.1} parent=19 // pred_region
          %p187 = scmp.lt.s32.totalorder %s24, 1
          %s188 = scalar_select %p187, %s24, 1
          %p189 = scmp.lt.s32.totalorder %s25, 0
          %s190 = scalar_select %p189, %s25, 0
          %s191 = smul.addr %s190, 60
          %s192 = smul.addr %s188, 60
          %s193 = sadd.s32 %s191, %s192
          %s194 = smul.addr %s193, 4
          %s195 = scalar_lea.vmem %s0, %s194
        $region24: #{tpu_custom_call.1} parent=19 // pred_fallthru
          _
      $region20: #{tpu_custom_call.1} parent=5 // pred_fallthru
        _
      %p196 = scmp.le.s32.totalorder 1, %s17
      %p197 = scmp.lt.s32.totalorder %s17, 3
      %p198 = pnand %p196, %p197
      %p199 = pneg %p198
      // Predicated region
      $region25: #{tpu_custom_call.1} parent=5 // pred_check
        _
      $region26: #{tpu_custom_call.1} parent=5 // pred_check_branch
        %201 = sbr.rel (%p198) target = $region28
      $region27: #{tpu_custom_call.1} parent=5 // pred_region
        %s202 = ssub.s32 %s17, 1
        %p203 = scmp.lt.s32.totalorder %s26, 1
        %s204 = scalar_select %p203, %s26, 1
        %p205 = scmp.lt.s32.totalorder %s27, 0
        %s206 = scalar_select %p205, %s27, 0
        %s207 = smul.addr %s206, 60
        %s208 = smul.addr %s204, 60
        %s209 = sadd.s32 %s207, %s208
        %s210 = smul.addr %s209, 4
        %s211 = scalar_lea.vmem %s0, %s210
        %p212 = pneg %p57
        %p213 = pneg %p54
        %p214 = pneg %p78
        %p215 = pneg %p75
        %p216 = pneg %p106
        %p217 = pneg %p103
        %s218 = smul.u32 16, %s27
        %p219 = scmp.lt.s32.totalorder %s26, 1
        %s220 = scalar_select %p219, %s26, 1
        %p221 = scmp.lt.s32.totalorder %s218, 15
        %s222 = scalar_select %p221, %s218, 15
        %s223 = smul.addr %s222, 2
        %s224 = smul.addr %s220, 32
        %s225 = sadd.s32 %s223, %s224
        %s226 = smul.addr %s225, 4
        %s227 = scalar_lea.vmem %s2, %s226
        %p228 = pneg %p134
        %p229 = pneg %p131
        %s230 = sand.u32 %s121, 1
        %s231 = scalar_lea.sflag [#allocation3], %s230
        %s232 = sand.u32 %s121, 1
        %s233 = scalar_lea.vmem [#allocation2], %s232
        %p234 = pneg %p162
        %p235 = pneg %p159
        %s236 = sand.u32 %s149, 1
        %s237 = scalar_lea.sflag [#allocation5], %s236
        %s238 = sand.u32 %s149, 1
        %s239 = scalar_lea.vmem [#allocation4], %s238
        %p240 = scmp.lt.s32.totalorder %s26, 1
        %s241 = scalar_select %p240, %s26, 1
        %p242 = scmp.lt.s32.totalorder %s27, 0
        %s243 = scalar_select %p242, %s27, 0
        %s244 = smul.addr %s243, 60
        %s245 = smul.addr %s241, 60
        %s246 = sadd.s32 %s244, %s245
        %s247 = smul.addr %s246, 4
        %s248 = scalar_lea.vmem %s0, %s247
        %s249 = smul.u32 16, %s27
        %p250 = scmp.lt.s32.totalorder %s26, 1
        %s251 = scalar_select %p250, %s26, 1
        %p252 = scmp.lt.s32.totalorder %s249, 15
        %s253 = scalar_select %p252, %s249, 15
        %s254 = smul.addr %s253, 2
        %s255 = smul.addr %s251, 32
        %s256 = sadd.s32 %s254, %s255
        %s257 = smul.addr %s256, 4
        %s258 = scalar_lea.vmem %s2, %s257
        %s259 = smul.u32 16, %s27
        %v261 = vld [vmem:[%s248] sm:$0xf]
        %v262 = vld [vmem:[%s248 + $0x4] sm:$0xf]
        %v263 = vld [vmem:[%s248 + $0x8] sm:$0x3]
        %v264 = vld [vmem:[%s248 + $0xc] sm:$0xf]
        %v265 = vld [vmem:[%s248 + $0x10] sm:$0xf]
        %v266 = vld [vmem:[%s248 + $0x14] sm:$0x3]
        %v267 = vld [vmem:[%s248 + $0x18] sm:$0xf]
        %v268 = vld [vmem:[%s248 + $0x1c] sm:$0xf]
        %v269 = vld [vmem:[%s248 + $0x20] sm:$0x3]
        %v270 = vld [vmem:[%s248 + $0x24] sm:$0xf]
        %v271 = vld [vmem:[%s248 + $0x28] sm:$0xf]
        %v272 = vld [vmem:[%s248 + $0x2c] sm:$0x3]
        %v273 = vld [vmem:[%s248 + $0x30] sm:$0xf]
        %v274 = vld [vmem:[%s248 + $0x34] sm:$0xf]
        %v275 = vld [vmem:[%s248 + $0x38] sm:$0x3]
        %v276 = vld [vmem:[%s248 + $0x3c] sm:$0xf]
        %v277 = vld [vmem:[%s248 + $0x40] sm:$0xf]
        %v278 = vld [vmem:[%s248 + $0x44] sm:$0x3]
        %v279 = vld [vmem:[%s248 + $0x48] sm:$0xf]
        %v280 = vld [vmem:[%s248 + $0x4c] sm:$0xf]
        %v281 = vld [vmem:[%s248 + $0x50] sm:$0x3]
        %v282 = vld [vmem:[%s248 + $0x54] sm:$0xf]
        %v283 = vld [vmem:[%s248 + $0x58] sm:$0xf]
        %v284 = vld [vmem:[%s248 + $0x5c] sm:$0x3]
        %v285 = vld [vmem:[%s248 + $0x60] sm:$0xf]
        %v286 = vld [vmem:[%s248 + $0x64] sm:$0xf]
        %v287 = vld [vmem:[%s248 + $0x68] sm:$0x3]
        %v288 = vld [vmem:[%s248 + $0x6c] sm:$0xf]
        %v289 = vld [vmem:[%s248 + $0x70] sm:$0xf]
        %v290 = vld [vmem:[%s248 + $0x74] sm:$0x3]
        %v291 = vld [vmem:[%s248 + $0x78] sm:$0xf]
        %v292 = vld [vmem:[%s248 + $0x7c] sm:$0xf]
        %v293 = vld [vmem:[%s248 + $0x80] sm:$0x3]
        %v294 = vld [vmem:[%s248 + $0x84] sm:$0xf]
        %v295 = vld [vmem:[%s248 + $0x88] sm:$0xf]
        %v296 = vld [vmem:[%s248 + $0x8c] sm:$0x3]
        %v297 = vld [vmem:[%s248 + $0x90] sm:$0xf]
        %v298 = vld [vmem:[%s248 + $0x94] sm:$0xf]
        %v299 = vld [vmem:[%s248 + $0x98] sm:$0x3]
        %v300 = vld [vmem:[%s248 + $0x9c] sm:$0xf]
        %v301 = vld [vmem:[%s248 + $0xa0] sm:$0xf]
        %v302 = vld [vmem:[%s248 + $0xa4] sm:$0x3]
        %v303 = vld [vmem:[%s248 + $0xa8] sm:$0xf]
        %v304 = vld [vmem:[%s248 + $0xac] sm:$0xf]
        %v305 = vld [vmem:[%s248 + $0xb0] sm:$0x3]
        %v306 = vld [vmem:[%s248 + $0xb4] sm:$0xf]
        %v307 = vld [vmem:[%s248 + $0xb8] sm:$0xf]
        %v308 = vld [vmem:[%s248 + $0xbc] sm:$0x3]
        %v309 = vld [vmem:[%s248 + $0xc0] sm:$0xf]
        %v310 = vld [vmem:[%s248 + $0xc4] sm:$0xf]
        %v311 = vld [vmem:[%s248 + $0xc8] sm:$0x3]
        %v312 = vld [vmem:[%s248 + $0xcc] sm:$0xf]
        %v313 = vld [vmem:[%s248 + $0xd0] sm:$0xf]
        %v314 = vld [vmem:[%s248 + $0xd4] sm:$0x3]
        %v315 = vld [vmem:[%s248 + $0xd8] sm:$0xf]
        %v316 = vld [vmem:[%s248 + $0xdc] sm:$0xf]
        %v317 = vld [vmem:[%s248 + $0xe0] sm:$0x3]
        %v318 = vld [vmem:[%s248 + $0xe4] sm:$0xf]
        %v319 = vld [vmem:[%s248 + $0xe8] sm:$0xf]
        %v320 = vld [vmem:[%s248 + $0xec] sm:$0x3]
        %v353 = vunpack.c.l.b16 %v261
        %v354 = vunpack.c.l.b16 %v262
        %v355 = vunpack.c.l.b16 %v264
        %v356 = vunpack.c.l.b16 %v265
        %v357 = vunpack.c.l.b16 %v267
        %v358 = vunpack.c.l.b16 %v268
        %v359 = vunpack.c.l.b16 %v270
        %v360 = vunpack.c.l.b16 %v271
        %v361 = vunpack.c.l.b16 %v273
        %v362 = vunpack.c.l.b16 %v274
        %v363 = vunpack.c.l.b16 %v276
        %v364 = vunpack.c.l.b16 %v277
        %v365 = vunpack.c.l.b16 %v279
        %v366 = vunpack.c.l.b16 %v280
        %v367 = vunpack.c.l.b16 %v282
        %v368 = vunpack.c.l.b16 %v283
        %v369 = vunpack.c.l.b16 %v285
        %v370 = vunpack.c.l.b16 %v286
        %v371 = vunpack.c.l.b16 %v288
        %v372 = vunpack.c.l.b16 %v289
        %v373 = vunpack.c.l.b16 %v291
        %v374 = vunpack.c.l.b16 %v292
        %v375 = vunpack.c.l.b16 %v294
        %v376 = vunpack.c.l.b16 %v295
        %v377 = vunpack.c.l.b16 %v297
        %v378 = vunpack.c.l.b16 %v298
        %v379 = vunpack.c.l.b16 %v300
        %v380 = vunpack.c.l.b16 %v301
        %v381 = vunpack.c.l.b16 %v303
        %v382 = vunpack.c.l.b16 %v304
        %v383 = vunpack.c.l.b16 %v306
        %v384 = vunpack.c.l.b16 %v307
        %v385 = vpack.c.b16 %v354, %v353
        %v386 = vpack.c.b16 %v356, %v355
        %v387 = vpack.c.b16 %v358, %v357
        %v388 = vpack.c.b16 %v360, %v359
        %v389 = vpack.c.b16 %v362, %v361
        %v390 = vpack.c.b16 %v364, %v363
        %v391 = vpack.c.b16 %v366, %v365
        %v392 = vpack.c.b16 %v368, %v367
        %v393 = vpack.c.b16 %v370, %v369
        %v394 = vpack.c.b16 %v372, %v371
        %v395 = vpack.c.b16 %v374, %v373
        %v396 = vpack.c.b16 %v376, %v375
        %v397 = vpack.c.b16 %v378, %v377
        %v398 = vpack.c.b16 %v380, %v379
        %v399 = vpack.c.b16 %v382, %v381
        %v400 = vpack.c.b16 %v384, %v383
        %v417 = vunpack.c.l.b16 %v263
        %v418 = vunpack.c.l.b16 %v266
        %v419 = vunpack.c.l.b16 %v269
        %v420 = vunpack.c.l.b16 %v272
        %v421 = vunpack.c.l.b16 %v275
        %v422 = vunpack.c.l.b16 %v278
        %v423 = vunpack.c.l.b16 %v281
        %v424 = vunpack.c.l.b16 %v284
        %v425 = vunpack.c.l.b16 %v287
        %v426 = vunpack.c.l.b16 %v290
        %v427 = vunpack.c.l.b16 %v293
        %v428 = vunpack.c.l.b16 %v296
        %v429 = vunpack.c.l.b16 %v299
        %v430 = vunpack.c.l.b16 %v302
        %v431 = vunpack.c.l.b16 %v305
        %v432 = vunpack.c.l.b16 %v308
        %v433 = vpack.c.b16 %v417, %v417
        %v434 = vpack.c.b16 %v418, %v418
        %v435 = vpack.c.b16 %v419, %v419
        %v436 = vpack.c.b16 %v420, %v420
        %v437 = vpack.c.b16 %v421, %v421
        %v438 = vpack.c.b16 %v422, %v422
        %v439 = vpack.c.b16 %v423, %v423
        %v440 = vpack.c.b16 %v424, %v424
        %v441 = vpack.c.b16 %v425, %v425
        %v442 = vpack.c.b16 %v426, %v426
        %v443 = vpack.c.b16 %v427, %v427
        %v444 = vpack.c.b16 %v428, %v428
        %v445 = vpack.c.b16 %v429, %v429
        %v446 = vpack.c.b16 %v430, %v430
        %v447 = vpack.c.b16 %v431, %v431
        %v448 = vpack.c.b16 %v432, %v432
        %vm449 = vsmask.f32 7424
        %v451 = vshrl.u32 %v385, 16
        %v453 = vshll.u32 %v385, 16
        %v455 = vrot.slane %v453, 1
        %v456 = vor.u32 %v451, %v455
        %v458 = vshll.u32 %v433, 16
        %v460 = vrot.slane %v458, 1
        %v461 = vsel %vm449, %v456, %v460
        %v463 = vshrl.u32 %v386, 16
        %v465 = vshll.u32 %v386, 16
        %v467 = vrot.slane %v465, 1
        %v468 = vor.u32 %v463, %v467
        %v470 = vshll.u32 %v434, 16
        %v472 = vrot.slane %v470, 1
        %v473 = vsel %vm449, %v468, %v472
        %v475 = vshrl.u32 %v387, 16
        %v477 = vshll.u32 %v387, 16
        %v479 = vrot.slane %v477, 1
        %v480 = vor.u32 %v475, %v479
        %v482 = vshll.u32 %v435, 16
        %v484 = vrot.slane %v482, 1
        %v485 = vsel %vm449, %v480, %v484
        %v487 = vshrl.u32 %v388, 16
        %v489 = vshll.u32 %v388, 16
        %v491 = vrot.slane %v489, 1
        %v492 = vor.u32 %v487, %v491
        %v494 = vshll.u32 %v436, 16
        %v496 = vrot.slane %v494, 1
        %v497 = vsel %vm449, %v492, %v496
        %v499 = vshrl.u32 %v389, 16
        %v501 = vshll.u32 %v389, 16
        %v503 = vrot.slane %v501, 1
        %v504 = vor.u32 %v499, %v503
        %v506 = vshll.u32 %v437, 16
        %v508 = vrot.slane %v506, 1
        %v509 = vsel %vm449, %v504, %v508
        %v511 = vshrl.u32 %v390, 16
        %v513 = vshll.u32 %v390, 16
        %v515 = vrot.slane %v513, 1
        %v516 = vor.u32 %v511, %v515
        %v518 = vshll.u32 %v438, 16
        %v520 = vrot.slane %v518, 1
        %v521 = vsel %vm449, %v516, %v520
        %v523 = vshrl.u32 %v391, 16
        %v525 = vshll.u32 %v391, 16
        %v527 = vrot.slane %v525, 1
        %v528 = vor.u32 %v523, %v527
        %v530 = vshll.u32 %v439, 16
        %v532 = vrot.slane %v530, 1
        %v533 = vsel %vm449, %v528, %v532
        %v535 = vshrl.u32 %v392, 16
        %v537 = vshll.u32 %v392, 16
        %v539 = vrot.slane %v537, 1
        %v540 = vor.u32 %v535, %v539
        %v542 = vshll.u32 %v440, 16
        %v544 = vrot.slane %v542, 1
        %v545 = vsel %vm449, %v540, %v544
        %v547 = vshrl.u32 %v393, 16
        %v549 = vshll.u32 %v393, 16
        %v551 = vrot.slane %v549, 1
        %v552 = vor.u32 %v547, %v551
        %v554 = vshll.u32 %v441, 16
        %v556 = vrot.slane %v554, 1
        %v557 = vsel %vm449, %v552, %v556
        %v559 = vshrl.u32 %v394, 16
        %v561 = vshll.u32 %v394, 16
        %v563 = vrot.slane %v561, 1
        %v564 = vor.u32 %v559, %v563
        %v566 = vshll.u32 %v442, 16
        %v568 = vrot.slane %v566, 1
        %v569 = vsel %vm449, %v564, %v568
        %v571 = vshrl.u32 %v395, 16
        %v573 = vshll.u32 %v395, 16
        %v575 = vrot.slane %v573, 1
        %v576 = vor.u32 %v571, %v575
        %v578 = vshll.u32 %v443, 16
        %v580 = vrot.slane %v578, 1
        %v581 = vsel %vm449, %v576, %v580
        %v583 = vshrl.u32 %v396, 16
        %v585 = vshll.u32 %v396, 16
        %v587 = vrot.slane %v585, 1
        %v588 = vor.u32 %v583, %v587
        %v590 = vshll.u32 %v444, 16
        %v592 = vrot.slane %v590, 1
        %v593 = vsel %vm449, %v588, %v592
        %v595 = vshrl.u32 %v397, 16
        %v597 = vshll.u32 %v397, 16
        %v599 = vrot.slane %v597, 1
        %v600 = vor.u32 %v595, %v599
        %v602 = vshll.u32 %v445, 16
        %v604 = vrot.slane %v602, 1
        %v605 = vsel %vm449, %v600, %v604
        %v607 = vshrl.u32 %v398, 16
        %v609 = vshll.u32 %v398, 16
        %v611 = vrot.slane %v609, 1
        %v612 = vor.u32 %v607, %v611
        %v614 = vshll.u32 %v446, 16
        %v616 = vrot.slane %v614, 1
        %v617 = vsel %vm449, %v612, %v616
        %v619 = vshrl.u32 %v399, 16
        %v621 = vshll.u32 %v399, 16
        %v623 = vrot.slane %v621, 1
        %v624 = vor.u32 %v619, %v623
        %v626 = vshll.u32 %v447, 16
        %v628 = vrot.slane %v626, 1
        %v629 = vsel %vm449, %v624, %v628
        %v631 = vshrl.u32 %v400, 16
        %v633 = vshll.u32 %v400, 16
        %v635 = vrot.slane %v633, 1
        %v636 = vor.u32 %v631, %v635
        %v638 = vshll.u32 %v448, 16
        %v640 = vrot.slane %v638, 1
        %v641 = vsel %vm449, %v636, %v640
        %642 = vrot.lane.b32.xlu0 %v461, 4
        %v643 = vpop.permute.xlu0 %642
        %644 = vrot.lane.b32.xlu0 %v473, 4
        %v645 = vpop.permute.xlu0 %644
        %646 = vrot.lane.b32.xlu0 %v485, 4
        %v647 = vpop.permute.xlu0 %646
        %648 = vrot.lane.b32.xlu0 %v497, 4
        %v649 = vpop.permute.xlu0 %648
        %650 = vrot.lane.b32.xlu0 %v509, 4
        %v651 = vpop.permute.xlu0 %650
        %652 = vrot.lane.b32.xlu0 %v521, 4
        %v653 = vpop.permute.xlu0 %652
        %654 = vrot.lane.b32.xlu0 %v533, 4
        %v655 = vpop.permute.xlu0 %654
        %656 = vrot.lane.b32.xlu0 %v545, 4
        %v657 = vpop.permute.xlu0 %656
        %658 = vrot.lane.b32.xlu0 %v557, 4
        %v659 = vpop.permute.xlu0 %658
        %660 = vrot.lane.b32.xlu0 %v569, 4
        %v661 = vpop.permute.xlu0 %660
        %662 = vrot.lane.b32.xlu0 %v581, 4
        %v663 = vpop.permute.xlu0 %662
        %664 = vrot.lane.b32.xlu0 %v593, 4
        %v665 = vpop.permute.xlu0 %664
        %666 = vrot.lane.b32.xlu0 %v605, 4
        %v667 = vpop.permute.xlu0 %666
        %668 = vrot.lane.b32.xlu0 %v617, 4
        %v669 = vpop.permute.xlu0 %668
        %670 = vrot.lane.b32.xlu0 %v629, 4
        %v671 = vpop.permute.xlu0 %670
        %672 = vrot.lane.b32.xlu0 %v641, 4
        %v673 = vpop.permute.xlu0 %672
        %vm674 = vcmask 1046528
        %v675 = vrot.slane %v385, 1
        %v676 = vrot.slane %v433, 1
        %v677 = vsel %vm674, %v675, %v676
        %v678 = vrot.slane %v386, 1
        %v679 = vrot.slane %v434, 1
        %v680 = vsel %vm674, %v678, %v679
        %v681 = vrot.slane %v387, 1
        %v682 = vrot.slane %v435, 1
        %v683 = vsel %vm674, %v681, %v682
        %v684 = vrot.slane %v388, 1
        %v685 = vrot.slane %v436, 1
        %v686 = vsel %vm674, %v684, %v685
        %v687 = vrot.slane %v389, 1
        %v688 = vrot.slane %v437, 1
        %v689 = vsel %vm674, %v687, %v688
        %v690 = vrot.slane %v390, 1
        %v691 = vrot.slane %v438, 1
        %v692 = vsel %vm674, %v690, %v691
        %v693 = vrot.slane %v391, 1
        %v694 = vrot.slane %v439, 1
        %v695 = vsel %vm674, %v693, %v694
        %v696 = vrot.slane %v392, 1
        %v697 = vrot.slane %v440, 1
        %v698 = vsel %vm674, %v696, %v697
        %v699 = vrot.slane %v393, 1
        %v700 = vrot.slane %v441, 1
        %v701 = vsel %vm674, %v699, %v700
        %v702 = vrot.slane %v394, 1
        %v703 = vrot.slane %v442, 1
        %v704 = vsel %vm674, %v702, %v703
        %v705 = vrot.slane %v395, 1
        %v706 = vrot.slane %v443, 1
        %v707 = vsel %vm674, %v705, %v706
        %v708 = vrot.slane %v396, 1
        %v709 = vrot.slane %v444, 1
        %v710 = vsel %vm674, %v708, %v709
        %v711 = vrot.slane %v397, 1
        %v712 = vrot.slane %v445, 1
        %v713 = vsel %vm674, %v711, %v712
        %v714 = vrot.slane %v398, 1
        %v715 = vrot.slane %v446, 1
        %v716 = vsel %vm674, %v714, %v715
        %v717 = vrot.slane %v399, 1
        %v718 = vrot.slane %v447, 1
        %v719 = vsel %vm674, %v717, %v718
        %v720 = vrot.slane %v400, 1
        %v721 = vrot.slane %v448, 1
        %v722 = vsel %vm674, %v720, %v721
        %723 = vrot.lane.b32.xlu0 %v677, 8
        %v724 = vpop.permute.xlu0 %723
        %725 = vrot.lane.b32.xlu0 %v680, 8
        %v726 = vpop.permute.xlu0 %725
        %727 = vrot.lane.b32.xlu0 %v683, 8
        %v728 = vpop.permute.xlu0 %727
        %729 = vrot.lane.b32.xlu0 %v686, 8
        %v730 = vpop.permute.xlu0 %729
        %731 = vrot.lane.b32.xlu0 %v689, 8
        %v732 = vpop.permute.xlu0 %731
        %733 = vrot.lane.b32.xlu0 %v692, 8
        %v734 = vpop.permute.xlu0 %733
        %735 = vrot.lane.b32.xlu0 %v695, 8
        %v736 = vpop.permute.xlu0 %735
        %737 = vrot.lane.b32.xlu0 %v698, 8
        %v738 = vpop.permute.xlu0 %737
        %739 = vrot.lane.b32.xlu0 %v701, 8
        %v740 = vpop.permute.xlu0 %739
        %741 = vrot.lane.b32.xlu0 %v704, 8
        %v742 = vpop.permute.xlu0 %741
        %743 = vrot.lane.b32.xlu0 %v707, 8
        %v744 = vpop.permute.xlu0 %743
        %745 = vrot.lane.b32.xlu0 %v710, 8
        %v746 = vpop.permute.xlu0 %745
        %747 = vrot.lane.b32.xlu0 %v713, 8
        %v748 = vpop.permute.xlu0 %747
        %749 = vrot.lane.b32.xlu0 %v716, 8
        %v750 = vpop.permute.xlu0 %749
        %751 = vrot.lane.b32.xlu0 %v719, 8
        %v752 = vpop.permute.xlu0 %751
        %753 = vrot.lane.b32.xlu0 %v722, 8
        %v754 = vpop.permute.xlu0 %753
        %vm755 = vsmask.f32 6400
        %v756 = vrot.slane %v451, 1
        %v757 = vrot.slane %v453, 2
        %v758 = vor.u32 %v756, %v757
        %v759 = vshrl.u32 %v433, 16
        %v761 = vrot.slane %v759, 1
        %v762 = vrot.slane %v458, 2
        %v763 = vor.u32 %v761, %v762
        %v764 = vsel %vm755, %v758, %v763
        %v765 = vrot.slane %v463, 1
        %v766 = vrot.slane %v465, 2
        %v767 = vor.u32 %v765, %v766
        %v768 = vshrl.u32 %v434, 16
        %v770 = vrot.slane %v768, 1
        %v771 = vrot.slane %v470, 2
        %v772 = vor.u32 %v770, %v771
        %v773 = vsel %vm755, %v767, %v772
        %v774 = vrot.slane %v475, 1
        %v775 = vrot.slane %v477, 2
        %v776 = vor.u32 %v774, %v775
        %v777 = vshrl.u32 %v435, 16
        %v779 = vrot.slane %v777, 1
        %v780 = vrot.slane %v482, 2
        %v781 = vor.u32 %v779, %v780
        %v782 = vsel %vm755, %v776, %v781
        %v783 = vrot.slane %v487, 1
        %v784 = vrot.slane %v489, 2
        %v785 = vor.u32 %v783, %v784
        %v786 = vshrl.u32 %v436, 16
        %v788 = vrot.slane %v786, 1
        %v789 = vrot.slane %v494, 2
        %v790 = vor.u32 %v788, %v789
        %v791 = vsel %vm755, %v785, %v790
        %v792 = vrot.slane %v499, 1
        %v793 = vrot.slane %v501, 2
        %v794 = vor.u32 %v792, %v793
        %v795 = vshrl.u32 %v437, 16
        %v797 = vrot.slane %v795, 1
        %v798 = vrot.slane %v506, 2
        %v799 = vor.u32 %v797, %v798
        %v800 = vsel %vm755, %v794, %v799
        %v801 = vrot.slane %v511, 1
        %v802 = vrot.slane %v513, 2
        %v803 = vor.u32 %v801, %v802
        %v804 = vshrl.u32 %v438, 16
        %v806 = vrot.slane %v804, 1
        %v807 = vrot.slane %v518, 2
        %v808 = vor.u32 %v806, %v807
        %v809 = vsel %vm755, %v803, %v808
        %v810 = vrot.slane %v523, 1
        %v811 = vrot.slane %v525, 2
        %v812 = vor.u32 %v810, %v811
        %v813 = vshrl.u32 %v439, 16
        %v815 = vrot.slane %v813, 1
        %v816 = vrot.slane %v530, 2
        %v817 = vor.u32 %v815, %v816
        %v818 = vsel %vm755, %v812, %v817
        %v819 = vrot.slane %v535, 1
        %v820 = vrot.slane %v537, 2
        %v821 = vor.u32 %v819, %v820
        %v822 = vshrl.u32 %v440, 16
        %v824 = vrot.slane %v822, 1
        %v825 = vrot.slane %v542, 2
        %v826 = vor.u32 %v824, %v825
        %v827 = vsel %vm755, %v821, %v826
        %v828 = vrot.slane %v547, 1
        %v829 = vrot.slane %v549, 2
        %v830 = vor.u32 %v828, %v829
        %v831 = vshrl.u32 %v441, 16
        %v833 = vrot.slane %v831, 1
        %v834 = vrot.slane %v554, 2
        %v835 = vor.u32 %v833, %v834
        %v836 = vsel %vm755, %v830, %v835
        %v837 = vrot.slane %v559, 1
        %v838 = vrot.slane %v561, 2
        %v839 = vor.u32 %v837, %v838
        %v840 = vshrl.u32 %v442, 16
        %v842 = vrot.slane %v840, 1
        %v843 = vrot.slane %v566, 2
        %v844 = vor.u32 %v842, %v843
        %v845 = vsel %vm755, %v839, %v844
        %v846 = vrot.slane %v571, 1
        %v847 = vrot.slane %v573, 2
        %v848 = vor.u32 %v846, %v847
        %v849 = vshrl.u32 %v443, 16
        %v851 = vrot.slane %v849, 1
        %v852 = vrot.slane %v578, 2
        %v853 = vor.u32 %v851, %v852
        %v854 = vsel %vm755, %v848, %v853
        %v855 = vrot.slane %v583, 1
        %v856 = vrot.slane %v585, 2
        %v857 = vor.u32 %v855, %v856
        %v858 = vshrl.u32 %v444, 16
        %v860 = vrot.slane %v858, 1
        %v861 = vrot.slane %v590, 2
        %v862 = vor.u32 %v860, %v861
        %v863 = vsel %vm755, %v857, %v862
        %v864 = vrot.slane %v595, 1
        %v865 = vrot.slane %v597, 2
        %v866 = vor.u32 %v864, %v865
        %v867 = vshrl.u32 %v445, 16
        %v869 = vrot.slane %v867, 1
        %v870 = vrot.slane %v602, 2
        %v871 = vor.u32 %v869, %v870
        %v872 = vsel %vm755, %v866, %v871
        %v873 = vrot.slane %v607, 1
        %v874 = vrot.slane %v609, 2
        %v875 = vor.u32 %v873, %v874
        %v876 = vshrl.u32 %v446, 16
        %v878 = vrot.slane %v876, 1
        %v879 = vrot.slane %v614, 2
        %v880 = vor.u32 %v878, %v879
        %v881 = vsel %vm755, %v875, %v880
        %v882 = vrot.slane %v619, 1
        %v883 = vrot.slane %v621, 2
        %v884 = vor.u32 %v882, %v883
        %v885 = vshrl.u32 %v447, 16
        %v887 = vrot.slane %v885, 1
        %v888 = vrot.slane %v626, 2
        %v889 = vor.u32 %v887, %v888
        %v890 = vsel %vm755, %v884, %v889
        %v891 = vrot.slane %v631, 1
        %v892 = vrot.slane %v633, 2
        %v893 = vor.u32 %v891, %v892
        %v894 = vshrl.u32 %v448, 16
        %v896 = vrot.slane %v894, 1
        %v897 = vrot.slane %v638, 2
        %v898 = vor.u32 %v896, %v897
        %v899 = vsel %vm755, %v893, %v898
        %900 = vrot.lane.b32.xlu0 %v764, 12
        %v901 = vpop.permute.xlu0 %900
        %902 = vrot.lane.b32.xlu0 %v773, 12
        %v903 = vpop.permute.xlu0 %902
        %904 = vrot.lane.b32.xlu0 %v782, 12
        %v905 = vpop.permute.xlu0 %904
        %906 = vrot.lane.b32.xlu0 %v791, 12
        %v907 = vpop.permute.xlu0 %906
        %908 = vrot.lane.b32.xlu0 %v800, 12
        %v909 = vpop.permute.xlu0 %908
        %910 = vrot.lane.b32.xlu0 %v809, 12
        %v911 = vpop.permute.xlu0 %910
        %912 = vrot.lane.b32.xlu0 %v818, 12
        %v913 = vpop.permute.xlu0 %912
        %914 = vrot.lane.b32.xlu0 %v827, 12
        %v915 = vpop.permute.xlu0 %914
        %916 = vrot.lane.b32.xlu0 %v836, 12
        %v917 = vpop.permute.xlu0 %916
        %918 = vrot.lane.b32.xlu0 %v845, 12
        %v919 = vpop.permute.xlu0 %918
        %920 = vrot.lane.b32.xlu0 %v854, 12
        %v921 = vpop.permute.xlu0 %920
        %922 = vrot.lane.b32.xlu0 %v863, 12
        %v923 = vpop.permute.xlu0 %922
        %924 = vrot.lane.b32.xlu0 %v872, 12
        %v925 = vpop.permute.xlu0 %924
        %926 = vrot.lane.b32.xlu0 %v881, 12
        %v927 = vpop.permute.xlu0 %926
        %928 = vrot.lane.b32.xlu0 %v890, 12
        %v929 = vpop.permute.xlu0 %928
        %930 = vrot.lane.b32.xlu0 %v899, 12
        %v931 = vpop.permute.xlu0 %930
        %vm932 = vcmask 1045504
        %v933 = vrot.slane %v385, 2
        %v934 = vrot.slane %v433, 2
        %v935 = vsel %vm932, %v933, %v934
        %v936 = vrot.slane %v386, 2
        %v937 = vrot.slane %v434, 2
        %v938 = vsel %vm932, %v936, %v937
        %v939 = vrot.slane %v387, 2
        %v940 = vrot.slane %v435, 2
        %v941 = vsel %vm932, %v939, %v940
        %v942 = vrot.slane %v388, 2
        %v943 = vrot.slane %v436, 2
        %v944 = vsel %vm932, %v942, %v943
        %v945 = vrot.slane %v389, 2
        %v946 = vrot.slane %v437, 2
        %v947 = vsel %vm932, %v945, %v946
        %v948 = vrot.slane %v390, 2
        %v949 = vrot.slane %v438, 2
        %v950 = vsel %vm932, %v948, %v949
        %v951 = vrot.slane %v391, 2
        %v952 = vrot.slane %v439, 2
        %v953 = vsel %vm932, %v951, %v952
        %v954 = vrot.slane %v392, 2
        %v955 = vrot.slane %v440, 2
        %v956 = vsel %vm932, %v954, %v955
        %v957 = vrot.slane %v393, 2
        %v958 = vrot.slane %v441, 2
        %v959 = vsel %vm932, %v957, %v958
        %v960 = vrot.slane %v394, 2
        %v961 = vrot.slane %v442, 2
        %v962 = vsel %vm932, %v960, %v961
        %v963 = vrot.slane %v395, 2
        %v964 = vrot.slane %v443, 2
        %v965 = vsel %vm932, %v963, %v964
        %v966 = vrot.slane %v396, 2
        %v967 = vrot.slane %v444, 2
        %v968 = vsel %vm932, %v966, %v967
        %v969 = vrot.slane %v397, 2
        %v970 = vrot.slane %v445, 2
        %v971 = vsel %vm932, %v969, %v970
        %v972 = vrot.slane %v398, 2
        %v973 = vrot.slane %v446, 2
        %v974 = vsel %vm932, %v972, %v973
        %v975 = vrot.slane %v399, 2
        %v976 = vrot.slane %v447, 2
        %v977 = vsel %vm932, %v975, %v976
        %v978 = vrot.slane %v400, 2
        %v979 = vrot.slane %v448, 2
        %v980 = vsel %vm932, %v978, %v979
        %981 = vrot.lane.b32.xlu0 %v935, 16
        %v982 = vpop.permute.xlu0 %981
        %983 = vrot.lane.b32.xlu0 %v938, 16
        %v984 = vpop.permute.xlu0 %983
        %985 = vrot.lane.b32.xlu0 %v941, 16
        %v986 = vpop.permute.xlu0 %985
        %987 = vrot.lane.b32.xlu0 %v944, 16
        %v988 = vpop.permute.xlu0 %987
        %989 = vrot.lane.b32.xlu0 %v947, 16
        %v990 = vpop.permute.xlu0 %989
        %991 = vrot.lane.b32.xlu0 %v950, 16
        %v992 = vpop.permute.xlu0 %991
        %993 = vrot.lane.b32.xlu0 %v953, 16
        %v994 = vpop.permute.xlu0 %993
        %995 = vrot.lane.b32.xlu0 %v956, 16
        %v996 = vpop.permute.xlu0 %995
        %997 = vrot.lane.b32.xlu0 %v959, 16
        %v998 = vpop.permute.xlu0 %997
        %999 = vrot.lane.b32.xlu0 %v962, 16
        %v1000 = vpop.permute.xlu0 %999
        %1001 = vrot.lane.b32.xlu0 %v965, 16
        %v1002 = vpop.permute.xlu0 %1001
        %1003 = vrot.lane.b32.xlu0 %v968, 16
        %v1004 = vpop.permute.xlu0 %1003
        %1005 = vrot.lane.b32.xlu0 %v971, 16
        %v1006 = vpop.permute.xlu0 %1005
        %1007 = vrot.lane.b32.xlu0 %v974, 16
        %v1008 = vpop.permute.xlu0 %1007
        %1009 = vrot.lane.b32.xlu0 %v977, 16
        %v1010 = vpop.permute.xlu0 %1009
        %1011 = vrot.lane.b32.xlu0 %v980, 16
        %v1012 = vpop.permute.xlu0 %1011
        %v1015 = vunpack.c.l.b16 %v309
        %v1016 = vunpack.c.l.b16 %v310
        %v1017 = vpack.c.b16 %v1016, %v1015
        %1018 = vrot.lane.b32.xlu0 %v386, 20
        %v1019 = vpop.permute.xlu0 %1018
        %1020 = vrot.lane.b32.xlu0 %v387, 20
        %v1021 = vpop.permute.xlu0 %1020
        %1022 = vrot.lane.b32.xlu0 %v388, 20
        %v1023 = vpop.permute.xlu0 %1022
        %1024 = vrot.lane.b32.xlu0 %v389, 20
        %v1025 = vpop.permute.xlu0 %1024
        %1026 = vrot.lane.b32.xlu0 %v390, 20
        %v1027 = vpop.permute.xlu0 %1026
        %1028 = vrot.lane.b32.xlu0 %v391, 20
        %v1029 = vpop.permute.xlu0 %1028
        %1030 = vrot.lane.b32.xlu0 %v392, 20
        %v1031 = vpop.permute.xlu0 %1030
        %1032 = vrot.lane.b32.xlu0 %v393, 20
        %v1033 = vpop.permute.xlu0 %1032
        %1034 = vrot.lane.b32.xlu0 %v394, 20
        %v1035 = vpop.permute.xlu0 %1034
        %1036 = vrot.lane.b32.xlu0 %v395, 20
        %v1037 = vpop.permute.xlu0 %1036
        %1038 = vrot.lane.b32.xlu0 %v396, 20
        %v1039 = vpop.permute.xlu0 %1038
        %1040 = vrot.lane.b32.xlu0 %v397, 20
        %v1041 = vpop.permute.xlu0 %1040
        %1042 = vrot.lane.b32.xlu0 %v398, 20
        %v1043 = vpop.permute.xlu0 %1042
        %1044 = vrot.lane.b32.xlu0 %v399, 20
        %v1045 = vpop.permute.xlu0 %1044
        %1046 = vrot.lane.b32.xlu0 %v400, 20
        %v1047 = vpop.permute.xlu0 %1046
        %1048 = vrot.lane.b32.xlu0 %v1017, 20
        %v1049 = vpop.permute.xlu0 %1048
        %v1051 = vunpack.c.l.b16 %v311
        %v1052 = vpack.c.b16 %v1051, %v1051
        %v1054 = vshrl.u32 %v1017, 16
        %v1056 = vshll.u32 %v1017, 16
        %v1058 = vrot.slane %v1056, 1
        %v1059 = vor.u32 %v1054, %v1058
        %v1061 = vshll.u32 %v1052, 16
        %v1063 = vrot.slane %v1061, 1
        %v1064 = vsel %vm449, %v1059, %v1063
        %1065 = vrot.lane.b32.xlu0 %v473, 24
        %v1066 = vpop.permute.xlu0 %1065
        %1067 = vrot.lane.b32.xlu0 %v485, 24
        %v1068 = vpop.permute.xlu0 %1067
        %1069 = vrot.lane.b32.xlu0 %v497, 24
        %v1070 = vpop.permute.xlu0 %1069
        %1071 = vrot.lane.b32.xlu0 %v509, 24
        %v1072 = vpop.permute.xlu0 %1071
        %1073 = vrot.lane.b32.xlu0 %v521, 24
        %v1074 = vpop.permute.xlu0 %1073
        %1075 = vrot.lane.b32.xlu0 %v533, 24
        %v1076 = vpop.permute.xlu0 %1075
        %1077 = vrot.lane.b32.xlu0 %v545, 24
        %v1078 = vpop.permute.xlu0 %1077
        %1079 = vrot.lane.b32.xlu0 %v557, 24
        %v1080 = vpop.permute.xlu0 %1079
        %1081 = vrot.lane.b32.xlu0 %v569, 24
        %v1082 = vpop.permute.xlu0 %1081
        %1083 = vrot.lane.b32.xlu0 %v581, 24
        %v1084 = vpop.permute.xlu0 %1083
        %1085 = vrot.lane.b32.xlu0 %v593, 24
        %v1086 = vpop.permute.xlu0 %1085
        %1087 = vrot.lane.b32.xlu0 %v605, 24
        %v1088 = vpop.permute.xlu0 %1087
        %1089 = vrot.lane.b32.xlu0 %v617, 24
        %v1090 = vpop.permute.xlu0 %1089
        %1091 = vrot.lane.b32.xlu0 %v629, 24
        %v1092 = vpop.permute.xlu0 %1091
        %1093 = vrot.lane.b32.xlu0 %v641, 24
        %v1094 = vpop.permute.xlu0 %1093
        %1095 = vrot.lane.b32.xlu0 %v1064, 24
        %v1096 = vpop.permute.xlu0 %1095
        %v1097 = vrot.slane %v1017, 1
        %v1098 = vrot.slane %v1052, 1
        %v1099 = vsel %vm674, %v1097, %v1098
        %1100 = vrot.lane.b32.xlu0 %v680, 28
        %v1101 = vpop.permute.xlu0 %1100
        %1102 = vrot.lane.b32.xlu0 %v683, 28
        %v1103 = vpop.permute.xlu0 %1102
        %1104 = vrot.lane.b32.xlu0 %v686, 28
        %v1105 = vpop.permute.xlu0 %1104
        %1106 = vrot.lane.b32.xlu0 %v689, 28
        %v1107 = vpop.permute.xlu0 %1106
        %1108 = vrot.lane.b32.xlu0 %v692, 28
        %v1109 = vpop.permute.xlu0 %1108
        %1110 = vrot.lane.b32.xlu0 %v695, 28
        %v1111 = vpop.permute.xlu0 %1110
        %1112 = vrot.lane.b32.xlu0 %v698, 28
        %v1113 = vpop.permute.xlu0 %1112
        %1114 = vrot.lane.b32.xlu0 %v701, 28
        %v1115 = vpop.permute.xlu0 %1114
        %1116 = vrot.lane.b32.xlu0 %v704, 28
        %v1117 = vpop.permute.xlu0 %1116
        %1118 = vrot.lane.b32.xlu0 %v707, 28
        %v1119 = vpop.permute.xlu0 %1118
        %1120 = vrot.lane.b32.xlu0 %v710, 28
        %v1121 = vpop.permute.xlu0 %1120
        %1122 = vrot.lane.b32.xlu0 %v713, 28
        %v1123 = vpop.permute.xlu0 %1122
        %1124 = vrot.lane.b32.xlu0 %v716, 28
        %v1125 = vpop.permute.xlu0 %1124
        %1126 = vrot.lane.b32.xlu0 %v719, 28
        %v1127 = vpop.permute.xlu0 %1126
        %1128 = vrot.lane.b32.xlu0 %v722, 28
        %v1129 = vpop.permute.xlu0 %1128
        %1130 = vrot.lane.b32.xlu0 %v1099, 28
        %v1131 = vpop.permute.xlu0 %1130
        %v1132 = vrot.slane %v1054, 1
        %v1133 = vrot.slane %v1056, 2
        %v1134 = vor.u32 %v1132, %v1133
        %v1135 = vshrl.u32 %v1052, 16
        %v1137 = vrot.slane %v1135, 1
        %v1138 = vrot.slane %v1061, 2
        %v1139 = vor.u32 %v1137, %v1138
        %v1140 = vsel %vm755, %v1134, %v1139
        %1141 = vrot.lane.b32.xlu0 %v773, 32
        %v1142 = vpop.permute.xlu0 %1141
        %1143 = vrot.lane.b32.xlu0 %v782, 32
        %v1144 = vpop.permute.xlu0 %1143
        %1145 = vrot.lane.b32.xlu0 %v791, 32
        %v1146 = vpop.permute.xlu0 %1145
        %1147 = vrot.lane.b32.xlu0 %v800, 32
        %v1148 = vpop.permute.xlu0 %1147
        %1149 = vrot.lane.b32.xlu0 %v809, 32
        %v1150 = vpop.permute.xlu0 %1149
        %1151 = vrot.lane.b32.xlu0 %v818, 32
        %v1152 = vpop.permute.xlu0 %1151
        %1153 = vrot.lane.b32.xlu0 %v827, 32
        %v1154 = vpop.permute.xlu0 %1153
        %1155 = vrot.lane.b32.xlu0 %v836, 32
        %v1156 = vpop.permute.xlu0 %1155
        %1157 = vrot.lane.b32.xlu0 %v845, 32
        %v1158 = vpop.permute.xlu0 %1157
        %1159 = vrot.lane.b32.xlu0 %v854, 32
        %v1160 = vpop.permute.xlu0 %1159
        %1161 = vrot.lane.b32.xlu0 %v863, 32
        %v1162 = vpop.permute.xlu0 %1161
        %1163 = vrot.lane.b32.xlu0 %v872, 32
        %v1164 = vpop.permute.xlu0 %1163
        %1165 = vrot.lane.b32.xlu0 %v881, 32
        %v1166 = vpop.permute.xlu0 %1165
        %1167 = vrot.lane.b32.xlu0 %v890, 32
        %v1168 = vpop.permute.xlu0 %1167
        %1169 = vrot.lane.b32.xlu0 %v899, 32
        %v1170 = vpop.permute.xlu0 %1169
        %1171 = vrot.lane.b32.xlu0 %v1140, 32
        %v1172 = vpop.permute.xlu0 %1171
        %v1173 = vrot.slane %v1017, 2
        %v1174 = vrot.slane %v1052, 2
        %v1175 = vsel %vm932, %v1173, %v1174
        %1176 = vrot.lane.b32.xlu0 %v938, 36
        %v1177 = vpop.permute.xlu0 %1176
        %1178 = vrot.lane.b32.xlu0 %v941, 36
        %v1179 = vpop.permute.xlu0 %1178
        %1180 = vrot.lane.b32.xlu0 %v944, 36
        %v1181 = vpop.permute.xlu0 %1180
        %1182 = vrot.lane.b32.xlu0 %v947, 36
        %v1183 = vpop.permute.xlu0 %1182
        %1184 = vrot.lane.b32.xlu0 %v950, 36
        %v1185 = vpop.permute.xlu0 %1184
        %1186 = vrot.lane.b32.xlu0 %v953, 36
        %v1187 = vpop.permute.xlu0 %1186
        %1188 = vrot.lane.b32.xlu0 %v956, 36
        %v1189 = vpop.permute.xlu0 %1188
        %1190 = vrot.lane.b32.xlu0 %v959, 36
        %v1191 = vpop.permute.xlu0 %1190
        %1192 = vrot.lane.b32.xlu0 %v962, 36
        %v1193 = vpop.permute.xlu0 %1192
        %1194 = vrot.lane.b32.xlu0 %v965, 36
        %v1195 = vpop.permute.xlu0 %1194
        %1196 = vrot.lane.b32.xlu0 %v968, 36
        %v1197 = vpop.permute.xlu0 %1196
        %1198 = vrot.lane.b32.xlu0 %v971, 36
        %v1199 = vpop.permute.xlu0 %1198
        %1200 = vrot.lane.b32.xlu0 %v974, 36
        %v1201 = vpop.permute.xlu0 %1200
        %1202 = vrot.lane.b32.xlu0 %v977, 36
        %v1203 = vpop.permute.xlu0 %1202
        %1204 = vrot.lane.b32.xlu0 %v980, 36
        %v1205 = vpop.permute.xlu0 %1204
        %1206 = vrot.lane.b32.xlu0 %v1175, 36
        %v1207 = vpop.permute.xlu0 %1206
        %v1210 = vunpack.c.l.b16 %v312
        %v1211 = vunpack.c.l.b16 %v313
        %v1212 = vpack.c.b16 %v1211, %v1210
        %1213 = vrot.lane.b32.xlu0 %v387, 40
        %v1214 = vpop.permute.xlu0 %1213
        %1215 = vrot.lane.b32.xlu0 %v388, 40
        %v1216 = vpop.permute.xlu0 %1215
        %1217 = vrot.lane.b32.xlu0 %v389, 40
        %v1218 = vpop.permute.xlu0 %1217
        %1219 = vrot.lane.b32.xlu0 %v390, 40
        %v1220 = vpop.permute.xlu0 %1219
        %1221 = vrot.lane.b32.xlu0 %v391, 40
        %v1222 = vpop.permute.xlu0 %1221
        %1223 = vrot.lane.b32.xlu0 %v392, 40
        %v1224 = vpop.permute.xlu0 %1223
        %1225 = vrot.lane.b32.xlu0 %v393, 40
        %v1226 = vpop.permute.xlu0 %1225
        %1227 = vrot.lane.b32.xlu0 %v394, 40
        %v1228 = vpop.permute.xlu0 %1227
        %1229 = vrot.lane.b32.xlu0 %v395, 40
        %v1230 = vpop.permute.xlu0 %1229
        %1231 = vrot.lane.b32.xlu0 %v396, 40
        %v1232 = vpop.permute.xlu0 %1231
        %1233 = vrot.lane.b32.xlu0 %v397, 40
        %v1234 = vpop.permute.xlu0 %1233
        %1235 = vrot.lane.b32.xlu0 %v398, 40
        %v1236 = vpop.permute.xlu0 %1235
        %1237 = vrot.lane.b32.xlu0 %v399, 40
        %v1238 = vpop.permute.xlu0 %1237
        %1239 = vrot.lane.b32.xlu0 %v400, 40
        %v1240 = vpop.permute.xlu0 %1239
        %1241 = vrot.lane.b32.xlu0 %v1017, 40
        %v1242 = vpop.permute.xlu0 %1241
        %1243 = vrot.lane.b32.xlu0 %v1212, 40
        %v1244 = vpop.permute.xlu0 %1243
        %v1246 = vunpack.c.l.b16 %v314
        %v1247 = vpack.c.b16 %v1246, %v1246
        %v1249 = vshrl.u32 %v1212, 16
        %v1251 = vshll.u32 %v1212, 16
        %v1253 = vrot.slane %v1251, 1
        %v1254 = vor.u32 %v1249, %v1253
        %v1256 = vshll.u32 %v1247, 16
        %v1258 = vrot.slane %v1256, 1
        %v1259 = vsel %vm449, %v1254, %v1258
        %1260 = vrot.lane.b32.xlu0 %v485, 44
        %v1261 = vpop.permute.xlu0 %1260
        %1262 = vrot.lane.b32.xlu0 %v497, 44
        %v1263 = vpop.permute.xlu0 %1262
        %1264 = vrot.lane.b32.xlu0 %v509, 44
        %v1265 = vpop.permute.xlu0 %1264
        %1266 = vrot.lane.b32.xlu0 %v521, 44
        %v1267 = vpop.permute.xlu0 %1266
        %1268 = vrot.lane.b32.xlu0 %v533, 44
        %v1269 = vpop.permute.xlu0 %1268
        %1270 = vrot.lane.b32.xlu0 %v545, 44
        %v1271 = vpop.permute.xlu0 %1270
        %1272 = vrot.lane.b32.xlu0 %v557, 44
        %v1273 = vpop.permute.xlu0 %1272
        %1274 = vrot.lane.b32.xlu0 %v569, 44
        %v1275 = vpop.permute.xlu0 %1274
        %1276 = vrot.lane.b32.xlu0 %v581, 44
        %v1277 = vpop.permute.xlu0 %1276
        %1278 = vrot.lane.b32.xlu0 %v593, 44
        %v1279 = vpop.permute.xlu0 %1278
        %1280 = vrot.lane.b32.xlu0 %v605, 44
        %v1281 = vpop.permute.xlu0 %1280
        %1282 = vrot.lane.b32.xlu0 %v617, 44
        %v1283 = vpop.permute.xlu0 %1282
        %1284 = vrot.lane.b32.xlu0 %v629, 44
        %v1285 = vpop.permute.xlu0 %1284
        %1286 = vrot.lane.b32.xlu0 %v641, 44
        %v1287 = vpop.permute.xlu0 %1286
        %1288 = vrot.lane.b32.xlu0 %v1064, 44
        %v1289 = vpop.permute.xlu0 %1288
        %1290 = vrot.lane.b32.xlu0 %v1259, 44
        %v1291 = vpop.permute.xlu0 %1290
        %v1292 = vrot.slane %v1212, 1
        %v1293 = vrot.slane %v1247, 1
        %v1294 = vsel %vm674, %v1292, %v1293
        %1295 = vrot.lane.b32.xlu0 %v683, 48
        %v1296 = vpop.permute.xlu0 %1295
        %1297 = vrot.lane.b32.xlu0 %v686, 48
        %v1298 = vpop.permute.xlu0 %1297
        %1299 = vrot.lane.b32.xlu0 %v689, 48
        %v1300 = vpop.permute.xlu0 %1299
        %1301 = vrot.lane.b32.xlu0 %v692, 48
        %v1302 = vpop.permute.xlu0 %1301
        %1303 = vrot.lane.b32.xlu0 %v695, 48
        %v1304 = vpop.permute.xlu0 %1303
        %1305 = vrot.lane.b32.xlu0 %v698, 48
        %v1306 = vpop.permute.xlu0 %1305
        %1307 = vrot.lane.b32.xlu0 %v701, 48
        %v1308 = vpop.permute.xlu0 %1307
        %1309 = vrot.lane.b32.xlu0 %v704, 48
        %v1310 = vpop.permute.xlu0 %1309
        %1311 = vrot.lane.b32.xlu0 %v707, 48
        %v1312 = vpop.permute.xlu0 %1311
        %1313 = vrot.lane.b32.xlu0 %v710, 48
        %v1314 = vpop.permute.xlu0 %1313
        %1315 = vrot.lane.b32.xlu0 %v713, 48
        %v1316 = vpop.permute.xlu0 %1315
        %1317 = vrot.lane.b32.xlu0 %v716, 48
        %v1318 = vpop.permute.xlu0 %1317
        %1319 = vrot.lane.b32.xlu0 %v719, 48
        %v1320 = vpop.permute.xlu0 %1319
        %1321 = vrot.lane.b32.xlu0 %v722, 48
        %v1322 = vpop.permute.xlu0 %1321
        %1323 = vrot.lane.b32.xlu0 %v1099, 48
        %v1324 = vpop.permute.xlu0 %1323
        %1325 = vrot.lane.b32.xlu0 %v1294, 48
        %v1326 = vpop.permute.xlu0 %1325
        %v1327 = vrot.slane %v1249, 1
        %v1328 = vrot.slane %v1251, 2
        %v1329 = vor.u32 %v1327, %v1328
        %v1330 = vshrl.u32 %v1247, 16
        %v1332 = vrot.slane %v1330, 1
        %v1333 = vrot.slane %v1256, 2
        %v1334 = vor.u32 %v1332, %v1333
        %v1335 = vsel %vm755, %v1329, %v1334
        %1336 = vrot.lane.b32.xlu0 %v782, 52
        %v1337 = vpop.permute.xlu0 %1336
        %1338 = vrot.lane.b32.xlu0 %v791, 52
        %v1339 = vpop.permute.xlu0 %1338
        %1340 = vrot.lane.b32.xlu0 %v800, 52
        %v1341 = vpop.permute.xlu0 %1340
        %1342 = vrot.lane.b32.xlu0 %v809, 52
        %v1343 = vpop.permute.xlu0 %1342
        %1344 = vrot.lane.b32.xlu0 %v818, 52
        %v1345 = vpop.permute.xlu0 %1344
        %1346 = vrot.lane.b32.xlu0 %v827, 52
        %v1347 = vpop.permute.xlu0 %1346
        %1348 = vrot.lane.b32.xlu0 %v836, 52
        %v1349 = vpop.permute.xlu0 %1348
        %1350 = vrot.lane.b32.xlu0 %v845, 52
        %v1351 = vpop.permute.xlu0 %1350
        %1352 = vrot.lane.b32.xlu0 %v854, 52
        %v1353 = vpop.permute.xlu0 %1352
        %1354 = vrot.lane.b32.xlu0 %v863, 52
        %v1355 = vpop.permute.xlu0 %1354
        %1356 = vrot.lane.b32.xlu0 %v872, 52
        %v1357 = vpop.permute.xlu0 %1356
        %1358 = vrot.lane.b32.xlu0 %v881, 52
        %v1359 = vpop.permute.xlu0 %1358
        %1360 = vrot.lane.b32.xlu0 %v890, 52
        %v1361 = vpop.permute.xlu0 %1360
        %1362 = vrot.lane.b32.xlu0 %v899, 52
        %v1363 = vpop.permute.xlu0 %1362
        %1364 = vrot.lane.b32.xlu0 %v1140, 52
        %v1365 = vpop.permute.xlu0 %1364
        %1366 = vrot.lane.b32.xlu0 %v1335, 52
        %v1367 = vpop.permute.xlu0 %1366
        %v1368 = vrot.slane %v1212, 2
        %v1369 = vrot.slane %v1247, 2
        %v1370 = vsel %vm932, %v1368, %v1369
        %1371 = vrot.lane.b32.xlu0 %v941, 56
        %v1372 = vpop.permute.xlu0 %1371
        %1373 = vrot.lane.b32.xlu0 %v944, 56
        %v1374 = vpop.permute.xlu0 %1373
        %1375 = vrot.lane.b32.xlu0 %v947, 56
        %v1376 = vpop.permute.xlu0 %1375
        %1377 = vrot.lane.b32.xlu0 %v950, 56
        %v1378 = vpop.permute.xlu0 %1377
        %1379 = vrot.lane.b32.xlu0 %v953, 56
        %v1380 = vpop.permute.xlu0 %1379
        %1381 = vrot.lane.b32.xlu0 %v956, 56
        %v1382 = vpop.permute.xlu0 %1381
        %1383 = vrot.lane.b32.xlu0 %v959, 56
        %v1384 = vpop.permute.xlu0 %1383
        %1385 = vrot.lane.b32.xlu0 %v962, 56
        %v1386 = vpop.permute.xlu0 %1385
        %1387 = vrot.lane.b32.xlu0 %v965, 56
        %v1388 = vpop.permute.xlu0 %1387
        %1389 = vrot.lane.b32.xlu0 %v968, 56
        %v1390 = vpop.permute.xlu0 %1389
        %1391 = vrot.lane.b32.xlu0 %v971, 56
        %v1392 = vpop.permute.xlu0 %1391
        %1393 = vrot.lane.b32.xlu0 %v974, 56
        %v1394 = vpop.permute.xlu0 %1393
        %1395 = vrot.lane.b32.xlu0 %v977, 56
        %v1396 = vpop.permute.xlu0 %1395
        %1397 = vrot.lane.b32.xlu0 %v980, 56
        %v1398 = vpop.permute.xlu0 %1397
        %1399 = vrot.lane.b32.xlu0 %v1175, 56
        %v1400 = vpop.permute.xlu0 %1399
        %1401 = vrot.lane.b32.xlu0 %v1370, 56
        %v1402 = vpop.permute.xlu0 %1401
        %v1405 = vunpack.c.l.b16 %v315
        %v1406 = vunpack.c.l.b16 %v316
        %v1407 = vpack.c.b16 %v1406, %v1405
        %1408 = vrot.lane.b32.xlu0 %v388, 60
        %v1409 = vpop.permute.xlu0 %1408
        %1410 = vrot.lane.b32.xlu0 %v389, 60
        %v1411 = vpop.permute.xlu0 %1410
        %1412 = vrot.lane.b32.xlu0 %v390, 60
        %v1413 = vpop.permute.xlu0 %1412
        %1414 = vrot.lane.b32.xlu0 %v391, 60
        %v1415 = vpop.permute.xlu0 %1414
        %1416 = vrot.lane.b32.xlu0 %v392, 60
        %v1417 = vpop.permute.xlu0 %1416
        %1418 = vrot.lane.b32.xlu0 %v393, 60
        %v1419 = vpop.permute.xlu0 %1418
        %1420 = vrot.lane.b32.xlu0 %v394, 60
        %v1421 = vpop.permute.xlu0 %1420
        %1422 = vrot.lane.b32.xlu0 %v395, 60
        %v1423 = vpop.permute.xlu0 %1422
        %1424 = vrot.lane.b32.xlu0 %v396, 60
        %v1425 = vpop.permute.xlu0 %1424
        %1426 = vrot.lane.b32.xlu0 %v397, 60
        %v1427 = vpop.permute.xlu0 %1426
        %1428 = vrot.lane.b32.xlu0 %v398, 60
        %v1429 = vpop.permute.xlu0 %1428
        %1430 = vrot.lane.b32.xlu0 %v399, 60
        %v1431 = vpop.permute.xlu0 %1430
        %1432 = vrot.lane.b32.xlu0 %v400, 60
        %v1433 = vpop.permute.xlu0 %1432
        %1434 = vrot.lane.b32.xlu0 %v1017, 60
        %v1435 = vpop.permute.xlu0 %1434
        %1436 = vrot.lane.b32.xlu0 %v1212, 60
        %v1437 = vpop.permute.xlu0 %1436
        %1438 = vrot.lane.b32.xlu0 %v1407, 60
        %v1439 = vpop.permute.xlu0 %1438
        %vm1440 = vcmask 31744
        %v1442 = vsel %vm1440, %v385, %v643
        %v1444 = vsel %vm1440, %v386, %v645
        %v1446 = vsel %vm1440, %v387, %v647
        %v1448 = vsel %vm1440, %v388, %v649
        %v1450 = vsel %vm1440, %v389, %v651
        %v1452 = vsel %vm1440, %v390, %v653
        %v1454 = vsel %vm1440, %v391, %v655
        %v1456 = vsel %vm1440, %v392, %v657
        %v1458 = vsel %vm1440, %v393, %v659
        %v1460 = vsel %vm1440, %v394, %v661
        %v1462 = vsel %vm1440, %v395, %v663
        %v1464 = vsel %vm1440, %v396, %v665
        %v1466 = vsel %vm1440, %v397, %v667
        %v1468 = vsel %vm1440, %v398, %v669
        %v1470 = vsel %vm1440, %v399, %v671
        %v1472 = vsel %vm1440, %v400, %v673
        %vm1473 = vcmask 64512
        %v1475 = vsel %vm1473, %v1442, %v724
        %v1477 = vsel %vm1473, %v1444, %v726
        %v1479 = vsel %vm1473, %v1446, %v728
        %v1481 = vsel %vm1473, %v1448, %v730
        %v1483 = vsel %vm1473, %v1450, %v732
        %v1485 = vsel %vm1473, %v1452, %v734
        %v1487 = vsel %vm1473, %v1454, %v736
        %v1489 = vsel %vm1473, %v1456, %v738
        %v1491 = vsel %vm1473, %v1458, %v740
        %v1493 = vsel %vm1473, %v1460, %v742
        %v1495 = vsel %vm1473, %v1462, %v744
        %v1497 = vsel %vm1473, %v1464, %v746
        %v1499 = vsel %vm1473, %v1466, %v748
        %v1501 = vsel %vm1473, %v1468, %v750
        %v1503 = vsel %vm1473, %v1470, %v752
        %v1505 = vsel %vm1473, %v1472, %v754
        %vm1506 = vcmask 97280
        %v1508 = vsel %vm1506, %v1475, %v901
        %v1510 = vsel %vm1506, %v1477, %v903
        %v1512 = vsel %vm1506, %v1479, %v905
        %v1514 = vsel %vm1506, %v1481, %v907
        %v1516 = vsel %vm1506, %v1483, %v909
        %v1518 = vsel %vm1506, %v1485, %v911
        %v1520 = vsel %vm1506, %v1487, %v913
        %v1522 = vsel %vm1506, %v1489, %v915
        %v1524 = vsel %vm1506, %v1491, %v917
        %v1526 = vsel %vm1506, %v1493, %v919
        %v1528 = vsel %vm1506, %v1495, %v921
        %v1530 = vsel %vm1506, %v1497, %v923
        %v1532 = vsel %vm1506, %v1499, %v925
        %v1534 = vsel %vm1506, %v1501, %v927
        %v1536 = vsel %vm1506, %v1503, %v929
        %v1538 = vsel %vm1506, %v1505, %v931
        %vm1539 = vcmask 130048
        %v1541 = vsel %vm1539, %v1508, %v982
        %v1543 = vsel %vm1539, %v1510, %v984
        %v1545 = vsel %vm1539, %v1512, %v986
        %v1547 = vsel %vm1539, %v1514, %v988
        %v1549 = vsel %vm1539, %v1516, %v990
        %v1551 = vsel %vm1539, %v1518, %v992
        %v1553 = vsel %vm1539, %v1520, %v994
        %v1555 = vsel %vm1539, %v1522, %v996
        %v1557 = vsel %vm1539, %v1524, %v998
        %v1559 = vsel %vm1539, %v1526, %v1000
        %v1561 = vsel %vm1539, %v1528, %v1002
        %v1563 = vsel %vm1539, %v1530, %v1004
        %v1565 = vsel %vm1539, %v1532, %v1006
        %v1567 = vsel %vm1539, %v1534, %v1008
        %v1569 = vsel %vm1539, %v1536, %v1010
        %v1571 = vsel %vm1539, %v1538, %v1012
        %vm1572 = vcmask 162816
        %v1574 = vsel %vm1572, %v1541, %v1019
        %v1576 = vsel %vm1572, %v1543, %v1021
        %v1578 = vsel %vm1572, %v1545, %v1023
        %v1580 = vsel %vm1572, %v1547, %v1025
        %v1582 = vsel %vm1572, %v1549, %v1027
        %v1584 = vsel %vm1572, %v1551, %v1029
        %v1586 = vsel %vm1572, %v1553, %v1031
        %v1588 = vsel %vm1572, %v1555, %v1033
        %v1590 = vsel %vm1572, %v1557, %v1035
        %v1592 = vsel %vm1572, %v1559, %v1037
        %v1594 = vsel %vm1572, %v1561, %v1039
        %v1596 = vsel %vm1572, %v1563, %v1041
        %v1598 = vsel %vm1572, %v1565, %v1043
        %v1600 = vsel %vm1572, %v1567, %v1045
        %v1602 = vsel %vm1572, %v1569, %v1047
        %v1604 = vsel %vm1572, %v1571, %v1049
        %vm1605 = vcmask 195584
        %v1607 = vsel %vm1605, %v1574, %v1066
        %v1609 = vsel %vm1605, %v1576, %v1068
        %v1611 = vsel %vm1605, %v1578, %v1070
        %v1613 = vsel %vm1605, %v1580, %v1072
        %v1615 = vsel %vm1605, %v1582, %v1074
        %v1617 = vsel %vm1605, %v1584, %v1076
        %v1619 = vsel %vm1605, %v1586, %v1078
        %v1621 = vsel %vm1605, %v1588, %v1080
        %v1623 = vsel %vm1605, %v1590, %v1082
        %v1625 = vsel %vm1605, %v1592, %v1084
        %v1627 = vsel %vm1605, %v1594, %v1086
        %v1629 = vsel %vm1605, %v1596, %v1088
        %v1631 = vsel %vm1605, %v1598, %v1090
        %v1633 = vsel %vm1605, %v1600, %v1092
        %v1635 = vsel %vm1605, %v1602, %v1094
        %v1637 = vsel %vm1605, %v1604, %v1096
        %vm1638 = vcmask 228352
        %v1640 = vsel %vm1638, %v1607, %v1101
        %v1642 = vsel %vm1638, %v1609, %v1103
        %v1644 = vsel %vm1638, %v1611, %v1105
        %v1646 = vsel %vm1638, %v1613, %v1107
        %v1648 = vsel %vm1638, %v1615, %v1109
        %v1650 = vsel %vm1638, %v1617, %v1111
        %v1652 = vsel %vm1638, %v1619, %v1113
        %v1654 = vsel %vm1638, %v1621, %v1115
        %v1656 = vsel %vm1638, %v1623, %v1117
        %v1658 = vsel %vm1638, %v1625, %v1119
        %v1660 = vsel %vm1638, %v1627, %v1121
        %v1662 = vsel %vm1638, %v1629, %v1123
        %v1664 = vsel %vm1638, %v1631, %v1125
        %v1666 = vsel %vm1638, %v1633, %v1127
        %v1668 = vsel %vm1638, %v1635, %v1129
        %v1670 = vsel %vm1638, %v1637, %v1131
        %vm1671 = vcmask 261120
        %v1673 = vsel %vm1671, %v1640, %v1142
        %v1675 = vsel %vm1671, %v1642, %v1144
        %v1677 = vsel %vm1671, %v1644, %v1146
        %v1679 = vsel %vm1671, %v1646, %v1148
        %v1681 = vsel %vm1671, %v1648, %v1150
        %v1683 = vsel %vm1671, %v1650, %v1152
        %v1685 = vsel %vm1671, %v1652, %v1154
        %v1687 = vsel %vm1671, %v1654, %v1156
        %v1689 = vsel %vm1671, %v1656, %v1158
        %v1691 = vsel %vm1671, %v1658, %v1160
        %v1693 = vsel %vm1671, %v1660, %v1162
        %v1695 = vsel %vm1671, %v1662, %v1164
        %v1697 = vsel %vm1671, %v1664, %v1166
        %v1699 = vsel %vm1671, %v1666, %v1168
        %v1701 = vsel %vm1671, %v1668, %v1170
        %v1703 = vsel %vm1671, %v1670, %v1172
        %vm1704 = vcmask 293888
        %v1706 = vsel %vm1704, %v1673, %v1177
        %v1708 = vsel %vm1704, %v1675, %v1179
        %v1710 = vsel %vm1704, %v1677, %v1181
        %v1712 = vsel %vm1704, %v1679, %v1183
        %v1714 = vsel %vm1704, %v1681, %v1185
        %v1716 = vsel %vm1704, %v1683, %v1187
        %v1718 = vsel %vm1704, %v1685, %v1189
        %v1720 = vsel %vm1704, %v1687, %v1191
        %v1722 = vsel %vm1704, %v1689, %v1193
        %v1724 = vsel %vm1704, %v1691, %v1195
        %v1726 = vsel %vm1704, %v1693, %v1197
        %v1728 = vsel %vm1704, %v1695, %v1199
        %v1730 = vsel %vm1704, %v1697, %v1201
        %v1732 = vsel %vm1704, %v1699, %v1203
        %v1734 = vsel %vm1704, %v1701, %v1205
        %v1736 = vsel %vm1704, %v1703, %v1207
        %vm1737 = vcmask 326656
        %v1739 = vsel %vm1737, %v1706, %v1214
        %v1741 = vsel %vm1737, %v1708, %v1216
        %v1743 = vsel %vm1737, %v1710, %v1218
        %v1745 = vsel %vm1737, %v1712, %v1220
        %v1747 = vsel %vm1737, %v1714, %v1222
        %v1749 = vsel %vm1737, %v1716, %v1224
        %v1751 = vsel %vm1737, %v1718, %v1226
        %v1753 = vsel %vm1737, %v1720, %v1228
        %v1755 = vsel %vm1737, %v1722, %v1230
        %v1757 = vsel %vm1737, %v1724, %v1232
        %v1759 = vsel %vm1737, %v1726, %v1234
        %v1761 = vsel %vm1737, %v1728, %v1236
        %v1763 = vsel %vm1737, %v1730, %v1238
        %v1765 = vsel %vm1737, %v1732, %v1240
        %v1767 = vsel %vm1737, %v1734, %v1242
        %v1769 = vsel %vm1737, %v1736, %v1244
        %vm1770 = vcmask 359424
        %v1772 = vsel %vm1770, %v1739, %v1261
        %v1774 = vsel %vm1770, %v1741, %v1263
        %v1776 = vsel %vm1770, %v1743, %v1265
        %v1778 = vsel %vm1770, %v1745, %v1267
        %v1780 = vsel %vm1770, %v1747, %v1269
        %v1782 = vsel %vm1770, %v1749, %v1271
        %v1784 = vsel %vm1770, %v1751, %v1273
        %v1786 = vsel %vm1770, %v1753, %v1275
        %v1788 = vsel %vm1770, %v1755, %v1277
        %v1790 = vsel %vm1770, %v1757, %v1279
        %v1792 = vsel %vm1770, %v1759, %v1281
        %v1794 = vsel %vm1770, %v1761, %v1283
        %v1796 = vsel %vm1770, %v1763, %v1285
        %v1798 = vsel %vm1770, %v1765, %v1287
        %v1800 = vsel %vm1770, %v1767, %v1289
        %v1802 = vsel %vm1770, %v1769, %v1291
        %vm1803 = vcmask 392192
        %v1805 = vsel %vm1803, %v1772, %v1296
        %v1807 = vsel %vm1803, %v1774, %v1298
        %v1809 = vsel %vm1803, %v1776, %v1300
        %v1811 = vsel %vm1803, %v1778, %v1302
        %v1813 = vsel %vm1803, %v1780, %v1304
        %v1815 = vsel %vm1803, %v1782, %v1306
        %v1817 = vsel %vm1803, %v1784, %v1308
        %v1819 = vsel %vm1803, %v1786, %v1310
        %v1821 = vsel %vm1803, %v1788, %v1312
        %v1823 = vsel %vm1803, %v1790, %v1314
        %v1825 = vsel %vm1803, %v1792, %v1316
        %v1827 = vsel %vm1803, %v1794, %v1318
        %v1829 = vsel %vm1803, %v1796, %v1320
        %v1831 = vsel %vm1803, %v1798, %v1322
        %v1833 = vsel %vm1803, %v1800, %v1324
        %v1835 = vsel %vm1803, %v1802, %v1326
        %vm1836 = vcmask 424960
        %v1838 = vsel %vm1836, %v1805, %v1337
        %v1840 = vsel %vm1836, %v1807, %v1339
        %v1842 = vsel %vm1836, %v1809, %v1341
        %v1844 = vsel %vm1836, %v1811, %v1343
        %v1846 = vsel %vm1836, %v1813, %v1345
        %v1848 = vsel %vm1836, %v1815, %v1347
        %v1850 = vsel %vm1836, %v1817, %v1349
        %v1852 = vsel %vm1836, %v1819, %v1351
        %v1854 = vsel %vm1836, %v1821, %v1353
        %v1856 = vsel %vm1836, %v1823, %v1355
        %v1858 = vsel %vm1836, %v1825, %v1357
        %v1860 = vsel %vm1836, %v1827, %v1359
        %v1862 = vsel %vm1836, %v1829, %v1361
        %v1864 = vsel %vm1836, %v1831, %v1363
        %v1866 = vsel %vm1836, %v1833, %v1365
        %v1868 = vsel %vm1836, %v1835, %v1367
        %vm1869 = vcmask 457728
        %v1871 = vsel %vm1869, %v1838, %v1372
        %v1873 = vsel %vm1869, %v1840, %v1374
        %v1875 = vsel %vm1869, %v1842, %v1376
        %v1877 = vsel %vm1869, %v1844, %v1378
        %v1879 = vsel %vm1869, %v1846, %v1380
        %v1881 = vsel %vm1869, %v1848, %v1382
        %v1883 = vsel %vm1869, %v1850, %v1384
        %v1885 = vsel %vm1869, %v1852, %v1386
        %v1887 = vsel %vm1869, %v1854, %v1388
        %v1889 = vsel %vm1869, %v1856, %v1390
        %v1891 = vsel %vm1869, %v1858, %v1392
        %v1893 = vsel %vm1869, %v1860, %v1394
        %v1895 = vsel %vm1869, %v1862, %v1396
        %v1897 = vsel %vm1869, %v1864, %v1398
        %v1899 = vsel %vm1869, %v1866, %v1400
        %v1901 = vsel %vm1869, %v1868, %v1402
        %vm1902 = vcmask 490496
        %v1904 = vsel %vm1902, %v1871, %v1409
        %v1906 = vsel %vm1902, %v1873, %v1411
        %v1908 = vsel %vm1902, %v1875, %v1413
        %v1910 = vsel %vm1902, %v1877, %v1415
        %v1912 = vsel %vm1902, %v1879, %v1417
        %v1914 = vsel %vm1902, %v1881, %v1419
        %v1916 = vsel %vm1902, %v1883, %v1421
        %v1918 = vsel %vm1902, %v1885, %v1423
        %v1920 = vsel %vm1902, %v1887, %v1425
        %v1922 = vsel %vm1902, %v1889, %v1427
        %v1924 = vsel %vm1902, %v1891, %v1429
        %v1926 = vsel %vm1902, %v1893, %v1431
        %v1928 = vsel %vm1902, %v1895, %v1433
        %v1930 = vsel %vm1902, %v1897, %v1435
        %v1932 = vsel %vm1902, %v1899, %v1437
        %v1934 = vsel %vm1902, %v1901, %v1439
        %v1936 = vunpack.c.l.b16 %v317
        %v1937 = vpack.c.b16 %v1936, %v1936
        %v1939 = vshrl.u32 %v1407, 16
        %v1941 = vshll.u32 %v1407, 16
        %v1943 = vrot.slane %v1941, 1
        %v1944 = vor.u32 %v1939, %v1943
        %v1946 = vshll.u32 %v1937, 16
        %v1948 = vrot.slane %v1946, 1
        %v1949 = vsel %vm449, %v1944, %v1948
        %v1950 = vshrl.u32 %v1937, 16
        %1952 = vrot.lane.b32.xlu0 %v786, 4
        %v1953 = vpop.permute.xlu0 %1952
        %1954 = vrot.lane.b32.xlu0 %v795, 4
        %v1955 = vpop.permute.xlu0 %1954
        %1956 = vrot.lane.b32.xlu0 %v804, 4
        %v1957 = vpop.permute.xlu0 %1956
        %1958 = vrot.lane.b32.xlu0 %v813, 4
        %v1959 = vpop.permute.xlu0 %1958
        %1960 = vrot.lane.b32.xlu0 %v822, 4
        %v1961 = vpop.permute.xlu0 %1960
        %1962 = vrot.lane.b32.xlu0 %v831, 4
        %v1963 = vpop.permute.xlu0 %1962
        %1964 = vrot.lane.b32.xlu0 %v840, 4
        %v1965 = vpop.permute.xlu0 %1964
        %1966 = vrot.lane.b32.xlu0 %v849, 4
        %v1967 = vpop.permute.xlu0 %1966
        %1968 = vrot.lane.b32.xlu0 %v858, 4
        %v1969 = vpop.permute.xlu0 %1968
        %1970 = vrot.lane.b32.xlu0 %v867, 4
        %v1971 = vpop.permute.xlu0 %1970
        %1972 = vrot.lane.b32.xlu0 %v876, 4
        %v1973 = vpop.permute.xlu0 %1972
        %1974 = vrot.lane.b32.xlu0 %v885, 4
        %v1975 = vpop.permute.xlu0 %1974
        %1976 = vrot.lane.b32.xlu0 %v894, 4
        %v1977 = vpop.permute.xlu0 %1976
        %1978 = vrot.lane.b32.xlu0 %v1064, 4
        %v1979 = vpop.permute.xlu0 %1978
        %1980 = vrot.lane.b32.xlu0 %v1135, 4
        %v1981 = vpop.permute.xlu0 %1980
        %1982 = vrot.lane.b32.xlu0 %v1259, 4
        %v1983 = vpop.permute.xlu0 %1982
        %1984 = vrot.lane.b32.xlu0 %v1330, 4
        %v1985 = vpop.permute.xlu0 %1984
        %1986 = vrot.lane.b32.xlu0 %v1949, 4
        %v1987 = vpop.permute.xlu0 %1986
        %1988 = vrot.lane.b32.xlu0 %v1950, 4
        %v1989 = vpop.permute.xlu0 %1988
        %v1990 = vrot.slane %v1407, 1
        %v1991 = vrot.slane %v1937, 1
        %v1992 = vsel %vm674, %v1990, %v1991
        %1993 = vrot.lane.b32.xlu0 %v685, 8
        %v1994 = vpop.permute.xlu0 %1993
        %1995 = vrot.lane.b32.xlu0 %v688, 8
        %v1996 = vpop.permute.xlu0 %1995
        %1997 = vrot.lane.b32.xlu0 %v691, 8
        %v1998 = vpop.permute.xlu0 %1997
        %1999 = vrot.lane.b32.xlu0 %v694, 8
        %v2000 = vpop.permute.xlu0 %1999
        %2001 = vrot.lane.b32.xlu0 %v697, 8
        %v2002 = vpop.permute.xlu0 %2001
        %2003 = vrot.lane.b32.xlu0 %v700, 8
        %v2004 = vpop.permute.xlu0 %2003
        %2005 = vrot.lane.b32.xlu0 %v703, 8
        %v2006 = vpop.permute.xlu0 %2005
        %2007 = vrot.lane.b32.xlu0 %v706, 8
        %v2008 = vpop.permute.xlu0 %2007
        %2009 = vrot.lane.b32.xlu0 %v709, 8
        %v2010 = vpop.permute.xlu0 %2009
        %2011 = vrot.lane.b32.xlu0 %v712, 8
        %v2012 = vpop.permute.xlu0 %2011
        %2013 = vrot.lane.b32.xlu0 %v715, 8
        %v2014 = vpop.permute.xlu0 %2013
        %2015 = vrot.lane.b32.xlu0 %v718, 8
        %v2016 = vpop.permute.xlu0 %2015
        %2017 = vrot.lane.b32.xlu0 %v721, 8
        %v2018 = vpop.permute.xlu0 %2017
        %2019 = vrot.lane.b32.xlu0 %v1099, 8
        %v2020 = vpop.permute.xlu0 %2019
        %2021 = vrot.lane.b32.xlu0 %v1098, 8
        %v2022 = vpop.permute.xlu0 %2021
        %2023 = vrot.lane.b32.xlu0 %v1294, 8
        %v2024 = vpop.permute.xlu0 %2023
        %2025 = vrot.lane.b32.xlu0 %v1293, 8
        %v2026 = vpop.permute.xlu0 %2025
        %2027 = vrot.lane.b32.xlu0 %v1992, 8
        %v2028 = vpop.permute.xlu0 %2027
        %2029 = vrot.lane.b32.xlu0 %v1991, 8
        %v2030 = vpop.permute.xlu0 %2029
        %v2031 = vrot.slane %v1939, 1
        %v2032 = vrot.slane %v1941, 2
        %v2033 = vor.u32 %v2031, %v2032
        %v2034 = vrot.slane %v1950, 1
        %v2035 = vrot.slane %v1946, 2
        %v2036 = vor.u32 %v2034, %v2035
        %v2037 = vsel %vm755, %v2033, %v2036
        %2038 = vrot.lane.b32.xlu0 %v788, 12
        %v2039 = vpop.permute.xlu0 %2038
        %2040 = vrot.lane.b32.xlu0 %v797, 12
        %v2041 = vpop.permute.xlu0 %2040
        %2042 = vrot.lane.b32.xlu0 %v806, 12
        %v2043 = vpop.permute.xlu0 %2042
        %2044 = vrot.lane.b32.xlu0 %v815, 12
        %v2045 = vpop.permute.xlu0 %2044
        %2046 = vrot.lane.b32.xlu0 %v824, 12
        %v2047 = vpop.permute.xlu0 %2046
        %2048 = vrot.lane.b32.xlu0 %v833, 12
        %v2049 = vpop.permute.xlu0 %2048
        %2050 = vrot.lane.b32.xlu0 %v842, 12
        %v2051 = vpop.permute.xlu0 %2050
        %2052 = vrot.lane.b32.xlu0 %v851, 12
        %v2053 = vpop.permute.xlu0 %2052
        %2054 = vrot.lane.b32.xlu0 %v860, 12
        %v2055 = vpop.permute.xlu0 %2054
        %2056 = vrot.lane.b32.xlu0 %v869, 12
        %v2057 = vpop.permute.xlu0 %2056
        %2058 = vrot.lane.b32.xlu0 %v878, 12
        %v2059 = vpop.permute.xlu0 %2058
        %2060 = vrot.lane.b32.xlu0 %v887, 12
        %v2061 = vpop.permute.xlu0 %2060
        %2062 = vrot.lane.b32.xlu0 %v896, 12
        %v2063 = vpop.permute.xlu0 %2062
        %2064 = vrot.lane.b32.xlu0 %v1140, 12
        %v2065 = vpop.permute.xlu0 %2064
        %2066 = vrot.lane.b32.xlu0 %v1137, 12
        %v2067 = vpop.permute.xlu0 %2066
        %2068 = vrot.lane.b32.xlu0 %v1335, 12
        %v2069 = vpop.permute.xlu0 %2068
        %2070 = vrot.lane.b32.xlu0 %v1332, 12
        %v2071 = vpop.permute.xlu0 %2070
        %2072 = vrot.lane.b32.xlu0 %v2037, 12
        %v2073 = vpop.permute.xlu0 %2072
        %2074 = vrot.lane.b32.xlu0 %v2034, 12
        %v2075 = vpop.permute.xlu0 %2074
        %v2078 = vunpack.c.l.b16 %v318
        %v2079 = vunpack.c.l.b16 %v319
        %v2080 = vpack.c.b16 %v2079, %v2078
        %v2081 = vrot.slane %v499, 7
        %v2082 = vor.u32 %v2081, %v501
        %v2083 = vrot.slane %v511, 7
        %v2084 = vor.u32 %v2083, %v513
        %v2085 = vrot.slane %v523, 7
        %v2086 = vor.u32 %v2085, %v525
        %v2087 = vrot.slane %v535, 7
        %v2088 = vor.u32 %v2087, %v537
        %v2089 = vrot.slane %v547, 7
        %v2090 = vor.u32 %v2089, %v549
        %v2091 = vrot.slane %v559, 7
        %v2092 = vor.u32 %v2091, %v561
        %v2093 = vrot.slane %v571, 7
        %v2094 = vor.u32 %v2093, %v573
        %v2095 = vrot.slane %v583, 7
        %v2096 = vor.u32 %v2095, %v585
        %v2097 = vrot.slane %v595, 7
        %v2098 = vor.u32 %v2097, %v597
        %v2099 = vrot.slane %v607, 7
        %v2100 = vor.u32 %v2099, %v609
        %v2101 = vrot.slane %v619, 7
        %v2102 = vor.u32 %v2101, %v621
        %v2103 = vrot.slane %v631, 7
        %v2104 = vor.u32 %v2103, %v633
        %v2105 = vrot.slane %v1054, 7
        %v2106 = vor.u32 %v2105, %v1056
        %v2107 = vrot.slane %v1249, 7
        %v2108 = vor.u32 %v2107, %v1251
        %v2109 = vrot.slane %v1939, 7
        %v2110 = vor.u32 %v2109, %v1941
        %v2112 = vshrl.u32 %v2080, 16
        %v2114 = vrot.slane %v2112, 7
        %v2115 = vshll.u32 %v2080, 16
        %v2117 = vor.u32 %v2114, %v2115
        %2118 = vrot.lane.b32.xlu0 %v2082, 16
        %v2119 = vpop.permute.xlu0 %2118
        %2120 = vrot.lane.b32.xlu0 %v2081, 16
        %v2121 = vpop.permute.xlu0 %2120
        %2122 = vrot.lane.b32.xlu0 %v2084, 16
        %v2123 = vpop.permute.xlu0 %2122
        %2124 = vrot.lane.b32.xlu0 %v2083, 16
        %v2125 = vpop.permute.xlu0 %2124
        %2126 = vrot.lane.b32.xlu0 %v2086, 16
        %v2127 = vpop.permute.xlu0 %2126
        %2128 = vrot.lane.b32.xlu0 %v2085, 16
        %v2129 = vpop.permute.xlu0 %2128
        %2130 = vrot.lane.b32.xlu0 %v2088, 16
        %v2131 = vpop.permute.xlu0 %2130
        %2132 = vrot.lane.b32.xlu0 %v2087, 16
        %v2133 = vpop.permute.xlu0 %2132
        %2134 = vrot.lane.b32.xlu0 %v2090, 16
        %v2135 = vpop.permute.xlu0 %2134
        %2136 = vrot.lane.b32.xlu0 %v2089, 16
        %v2137 = vpop.permute.xlu0 %2136
        %2138 = vrot.lane.b32.xlu0 %v2092, 16
        %v2139 = vpop.permute.xlu0 %2138
        %2140 = vrot.lane.b32.xlu0 %v2091, 16
        %v2141 = vpop.permute.xlu0 %2140
        %2142 = vrot.lane.b32.xlu0 %v2094, 16
        %v2143 = vpop.permute.xlu0 %2142
        %2144 = vrot.lane.b32.xlu0 %v2093, 16
        %v2145 = vpop.permute.xlu0 %2144
        %2146 = vrot.lane.b32.xlu0 %v2096, 16
        %v2147 = vpop.permute.xlu0 %2146
        %2148 = vrot.lane.b32.xlu0 %v2095, 16
        %v2149 = vpop.permute.xlu0 %2148
        %2150 = vrot.lane.b32.xlu0 %v2098, 16
        %v2151 = vpop.permute.xlu0 %2150
        %2152 = vrot.lane.b32.xlu0 %v2097, 16
        %v2153 = vpop.permute.xlu0 %2152
        %2154 = vrot.lane.b32.xlu0 %v2100, 16
        %v2155 = vpop.permute.xlu0 %2154
        %2156 = vrot.lane.b32.xlu0 %v2099, 16
        %v2157 = vpop.permute.xlu0 %2156
        %2158 = vrot.lane.b32.xlu0 %v2102, 16
        %v2159 = vpop.permute.xlu0 %2158
        %2160 = vrot.lane.b32.xlu0 %v2101, 16
        %v2161 = vpop.permute.xlu0 %2160
        %2162 = vrot.lane.b32.xlu0 %v2104, 16
        %v2163 = vpop.permute.xlu0 %2162
        %2164 = vrot.lane.b32.xlu0 %v2103, 16
        %v2165 = vpop.permute.xlu0 %2164
        %2166 = vrot.lane.b32.xlu0 %v2106, 16
        %v2167 = vpop.permute.xlu0 %2166
        %2168 = vrot.lane.b32.xlu0 %v2105, 16
        %v2169 = vpop.permute.xlu0 %2168
        %2170 = vrot.lane.b32.xlu0 %v2108, 16
        %v2171 = vpop.permute.xlu0 %2170
        %2172 = vrot.lane.b32.xlu0 %v2107, 16
        %v2173 = vpop.permute.xlu0 %2172
        %2174 = vrot.lane.b32.xlu0 %v2110, 16
        %v2175 = vpop.permute.xlu0 %2174
        %2176 = vrot.lane.b32.xlu0 %v2109, 16
        %v2177 = vpop.permute.xlu0 %2176
        %2178 = vrot.lane.b32.xlu0 %v2117, 16
        %v2179 = vpop.permute.xlu0 %2178
        %2180 = vrot.lane.b32.xlu0 %v2114, 16
        %v2181 = vpop.permute.xlu0 %2180
        %v2183 = vunpack.c.l.b16 %v320
        %v2184 = vpack.c.b16 %v2183, %v2183
        %2185 = vrot.lane.b32.xlu0 %v437, 20
        %v2186 = vpop.permute.xlu0 %2185
        %2187 = vrot.lane.b32.xlu0 %v438, 20
        %v2188 = vpop.permute.xlu0 %2187
        %2189 = vrot.lane.b32.xlu0 %v439, 20
        %v2190 = vpop.permute.xlu0 %2189
        %2191 = vrot.lane.b32.xlu0 %v440, 20
        %v2192 = vpop.permute.xlu0 %2191
        %2193 = vrot.lane.b32.xlu0 %v441, 20
        %v2194 = vpop.permute.xlu0 %2193
        %2195 = vrot.lane.b32.xlu0 %v442, 20
        %v2196 = vpop.permute.xlu0 %2195
        %2197 = vrot.lane.b32.xlu0 %v443, 20
        %v2198 = vpop.permute.xlu0 %2197
        %2199 = vrot.lane.b32.xlu0 %v444, 20
        %v2200 = vpop.permute.xlu0 %2199
        %2201 = vrot.lane.b32.xlu0 %v445, 20
        %v2202 = vpop.permute.xlu0 %2201
        %2203 = vrot.lane.b32.xlu0 %v446, 20
        %v2204 = vpop.permute.xlu0 %2203
        %2205 = vrot.lane.b32.xlu0 %v447, 20
        %v2206 = vpop.permute.xlu0 %2205
        %2207 = vrot.lane.b32.xlu0 %v448, 20
        %v2208 = vpop.permute.xlu0 %2207
        %2209 = vrot.lane.b32.xlu0 %v1052, 20
        %v2210 = vpop.permute.xlu0 %2209
        %2211 = vrot.lane.b32.xlu0 %v1212, 20
        %v2212 = vpop.permute.xlu0 %2211
        %2213 = vrot.lane.b32.xlu0 %v1247, 20
        %v2214 = vpop.permute.xlu0 %2213
        %2215 = vrot.lane.b32.xlu0 %v1407, 20
        %v2216 = vpop.permute.xlu0 %2215
        %2217 = vrot.lane.b32.xlu0 %v1937, 20
        %v2218 = vpop.permute.xlu0 %2217
        %2219 = vrot.lane.b32.xlu0 %v2080, 20
        %v2220 = vpop.permute.xlu0 %2219
        %2221 = vrot.lane.b32.xlu0 %v2184, 20
        %v2222 = vpop.permute.xlu0 %2221
        %v2223 = vrot.slane %v2115, 1
        %v2224 = vor.u32 %v2112, %v2223
        %v2226 = vshll.u32 %v2184, 16
        %v2228 = vrot.slane %v2226, 1
        %v2229 = vsel %vm449, %v2224, %v2228
        %v2230 = vshrl.u32 %v2184, 16
        %2232 = vrot.lane.b32.xlu0 %v795, 24
        %v2233 = vpop.permute.xlu0 %2232
        %2234 = vrot.lane.b32.xlu0 %v804, 24
        %v2235 = vpop.permute.xlu0 %2234
        %2236 = vrot.lane.b32.xlu0 %v813, 24
        %v2237 = vpop.permute.xlu0 %2236
        %2238 = vrot.lane.b32.xlu0 %v822, 24
        %v2239 = vpop.permute.xlu0 %2238
        %2240 = vrot.lane.b32.xlu0 %v831, 24
        %v2241 = vpop.permute.xlu0 %2240
        %2242 = vrot.lane.b32.xlu0 %v840, 24
        %v2243 = vpop.permute.xlu0 %2242
        %2244 = vrot.lane.b32.xlu0 %v849, 24
        %v2245 = vpop.permute.xlu0 %2244
        %2246 = vrot.lane.b32.xlu0 %v858, 24
        %v2247 = vpop.permute.xlu0 %2246
        %2248 = vrot.lane.b32.xlu0 %v867, 24
        %v2249 = vpop.permute.xlu0 %2248
        %2250 = vrot.lane.b32.xlu0 %v876, 24
        %v2251 = vpop.permute.xlu0 %2250
        %2252 = vrot.lane.b32.xlu0 %v885, 24
        %v2253 = vpop.permute.xlu0 %2252
        %2254 = vrot.lane.b32.xlu0 %v894, 24
        %v2255 = vpop.permute.xlu0 %2254
        %2256 = vrot.lane.b32.xlu0 %v1135, 24
        %v2257 = vpop.permute.xlu0 %2256
        %2258 = vrot.lane.b32.xlu0 %v1259, 24
        %v2259 = vpop.permute.xlu0 %2258
        %2260 = vrot.lane.b32.xlu0 %v1330, 24
        %v2261 = vpop.permute.xlu0 %2260
        %2262 = vrot.lane.b32.xlu0 %v1949, 24
        %v2263 = vpop.permute.xlu0 %2262
        %2264 = vrot.lane.b32.xlu0 %v1950, 24
        %v2265 = vpop.permute.xlu0 %2264
        %2266 = vrot.lane.b32.xlu0 %v2229, 24
        %v2267 = vpop.permute.xlu0 %2266
        %2268 = vrot.lane.b32.xlu0 %v2230, 24
        %v2269 = vpop.permute.xlu0 %2268
        %v2270 = vrot.slane %v2080, 1
        %v2271 = vrot.slane %v2184, 1
        %v2272 = vsel %vm674, %v2270, %v2271
        %2273 = vrot.lane.b32.xlu0 %v688, 28
        %v2274 = vpop.permute.xlu0 %2273
        %2275 = vrot.lane.b32.xlu0 %v691, 28
        %v2276 = vpop.permute.xlu0 %2275
        %2277 = vrot.lane.b32.xlu0 %v694, 28
        %v2278 = vpop.permute.xlu0 %2277
        %2279 = vrot.lane.b32.xlu0 %v697, 28
        %v2280 = vpop.permute.xlu0 %2279
        %2281 = vrot.lane.b32.xlu0 %v700, 28
        %v2282 = vpop.permute.xlu0 %2281
        %2283 = vrot.lane.b32.xlu0 %v703, 28
        %v2284 = vpop.permute.xlu0 %2283
        %2285 = vrot.lane.b32.xlu0 %v706, 28
        %v2286 = vpop.permute.xlu0 %2285
        %2287 = vrot.lane.b32.xlu0 %v709, 28
        %v2288 = vpop.permute.xlu0 %2287
        %2289 = vrot.lane.b32.xlu0 %v712, 28
        %v2290 = vpop.permute.xlu0 %2289
        %2291 = vrot.lane.b32.xlu0 %v715, 28
        %v2292 = vpop.permute.xlu0 %2291
        %2293 = vrot.lane.b32.xlu0 %v718, 28
        %v2294 = vpop.permute.xlu0 %2293
        %2295 = vrot.lane.b32.xlu0 %v721, 28
        %v2296 = vpop.permute.xlu0 %2295
        %2297 = vrot.lane.b32.xlu0 %v1098, 28
        %v2298 = vpop.permute.xlu0 %2297
        %2299 = vrot.lane.b32.xlu0 %v1294, 28
        %v2300 = vpop.permute.xlu0 %2299
        %2301 = vrot.lane.b32.xlu0 %v1293, 28
        %v2302 = vpop.permute.xlu0 %2301
        %2303 = vrot.lane.b32.xlu0 %v1992, 28
        %v2304 = vpop.permute.xlu0 %2303
        %2305 = vrot.lane.b32.xlu0 %v1991, 28
        %v2306 = vpop.permute.xlu0 %2305
        %2307 = vrot.lane.b32.xlu0 %v2272, 28
        %v2308 = vpop.permute.xlu0 %2307
        %2309 = vrot.lane.b32.xlu0 %v2271, 28
        %v2310 = vpop.permute.xlu0 %2309
        %v2311 = vrot.slane %v2112, 1
        %v2312 = vrot.slane %v2115, 2
        %v2313 = vor.u32 %v2311, %v2312
        %v2314 = vrot.slane %v2230, 1
        %v2315 = vrot.slane %v2226, 2
        %v2316 = vor.u32 %v2314, %v2315
        %v2317 = vsel %vm755, %v2313, %v2316
        %2318 = vrot.lane.b32.xlu0 %v797, 32
        %v2319 = vpop.permute.xlu0 %2318
        %2320 = vrot.lane.b32.xlu0 %v806, 32
        %v2321 = vpop.permute.xlu0 %2320
        %2322 = vrot.lane.b32.xlu0 %v815, 32
        %v2323 = vpop.permute.xlu0 %2322
        %2324 = vrot.lane.b32.xlu0 %v824, 32
        %v2325 = vpop.permute.xlu0 %2324
        %2326 = vrot.lane.b32.xlu0 %v833, 32
        %v2327 = vpop.permute.xlu0 %2326
        %2328 = vrot.lane.b32.xlu0 %v842, 32
        %v2329 = vpop.permute.xlu0 %2328
        %2330 = vrot.lane.b32.xlu0 %v851, 32
        %v2331 = vpop.permute.xlu0 %2330
        %2332 = vrot.lane.b32.xlu0 %v860, 32
        %v2333 = vpop.permute.xlu0 %2332
        %2334 = vrot.lane.b32.xlu0 %v869, 32
        %v2335 = vpop.permute.xlu0 %2334
        %2336 = vrot.lane.b32.xlu0 %v878, 32
        %v2337 = vpop.permute.xlu0 %2336
        %2338 = vrot.lane.b32.xlu0 %v887, 32
        %v2339 = vpop.permute.xlu0 %2338
        %2340 = vrot.lane.b32.xlu0 %v896, 32
        %v2341 = vpop.permute.xlu0 %2340
        %2342 = vrot.lane.b32.xlu0 %v1137, 32
        %v2343 = vpop.permute.xlu0 %2342
        %2344 = vrot.lane.b32.xlu0 %v1335, 32
        %v2345 = vpop.permute.xlu0 %2344
        %2346 = vrot.lane.b32.xlu0 %v1332, 32
        %v2347 = vpop.permute.xlu0 %2346
        %2348 = vrot.lane.b32.xlu0 %v2037, 32
        %v2349 = vpop.permute.xlu0 %2348
        %2350 = vrot.lane.b32.xlu0 %v2034, 32
        %v2351 = vpop.permute.xlu0 %2350
        %2352 = vrot.lane.b32.xlu0 %v2317, 32
        %v2353 = vpop.permute.xlu0 %2352
        %2354 = vrot.lane.b32.xlu0 %v2314, 32
        %v2355 = vpop.permute.xlu0 %2354
        %v2357 = vsel %vm1440, %v436, %v1953
        %v2359 = vsel %vm1440, %v437, %v1955
        %v2361 = vsel %vm1440, %v438, %v1957
        %v2363 = vsel %vm1440, %v439, %v1959
        %v2365 = vsel %vm1440, %v440, %v1961
        %v2367 = vsel %vm1440, %v441, %v1963
        %v2369 = vsel %vm1440, %v442, %v1965
        %v2371 = vsel %vm1440, %v443, %v1967
        %v2373 = vsel %vm1440, %v444, %v1969
        %v2375 = vsel %vm1440, %v445, %v1971
        %v2377 = vsel %vm1440, %v446, %v1973
        %v2379 = vsel %vm1440, %v447, %v1975
        %v2381 = vsel %vm1440, %v448, %v1977
        %v2383 = vsel %vm1440, %v1017, %v1979
        %v2385 = vsel %vm1440, %v1052, %v1981
        %v2387 = vsel %vm1440, %v1212, %v1983
        %v2389 = vsel %vm1440, %v1247, %v1985
        %v2391 = vsel %vm1440, %v1407, %v1987
        %v2393 = vsel %vm1440, %v1937, %v1989
        %v2395 = vsel %vm1473, %v2357, %v1994
        %v2397 = vsel %vm1473, %v2359, %v1996
        %v2399 = vsel %vm1473, %v2361, %v1998
        %v2401 = vsel %vm1473, %v2363, %v2000
        %v2403 = vsel %vm1473, %v2365, %v2002
        %v2405 = vsel %vm1473, %v2367, %v2004
        %v2407 = vsel %vm1473, %v2369, %v2006
        %v2409 = vsel %vm1473, %v2371, %v2008
        %v2411 = vsel %vm1473, %v2373, %v2010
        %v2413 = vsel %vm1473, %v2375, %v2012
        %v2415 = vsel %vm1473, %v2377, %v2014
        %v2417 = vsel %vm1473, %v2379, %v2016
        %v2419 = vsel %vm1473, %v2381, %v2018
        %v2421 = vsel %vm1473, %v2383, %v2020
        %v2423 = vsel %vm1473, %v2385, %v2022
        %v2425 = vsel %vm1473, %v2387, %v2024
        %v2427 = vsel %vm1473, %v2389, %v2026
        %v2429 = vsel %vm1473, %v2391, %v2028
        %v2431 = vsel %vm1473, %v2393, %v2030
        %v2433 = vsel %vm1506, %v2395, %v2039
        %v2435 = vsel %vm1506, %v2397, %v2041
        %v2437 = vsel %vm1506, %v2399, %v2043
        %v2439 = vsel %vm1506, %v2401, %v2045
        %v2441 = vsel %vm1506, %v2403, %v2047
        %v2443 = vsel %vm1506, %v2405, %v2049
        %v2445 = vsel %vm1506, %v2407, %v2051
        %v2447 = vsel %vm1506, %v2409, %v2053
        %v2449 = vsel %vm1506, %v2411, %v2055
        %v2451 = vsel %vm1506, %v2413, %v2057
        %v2453 = vsel %vm1506, %v2415, %v2059
        %v2455 = vsel %vm1506, %v2417, %v2061
        %v2457 = vsel %vm1506, %v2419, %v2063
        %v2459 = vsel %vm1506, %v2421, %v2065
        %v2461 = vsel %vm1506, %v2423, %v2067
        %v2463 = vsel %vm1506, %v2425, %v2069
        %v2465 = vsel %vm1506, %v2427, %v2071
        %v2467 = vsel %vm1506, %v2429, %v2073
        %v2469 = vsel %vm1506, %v2431, %v2075
        %v2471 = vsel %vm1539, %v1514, %v2119
        %v2473 = vsel %vm1539, %v2433, %v2121
        %v2475 = vsel %vm1539, %v1516, %v2123
        %v2477 = vsel %vm1539, %v2435, %v2125
        %v2479 = vsel %vm1539, %v1518, %v2127
        %v2481 = vsel %vm1539, %v2437, %v2129
        %v2483 = vsel %vm1539, %v1520, %v2131
        %v2485 = vsel %vm1539, %v2439, %v2133
        %v2487 = vsel %vm1539, %v1522, %v2135
        %v2489 = vsel %vm1539, %v2441, %v2137
        %v2491 = vsel %vm1539, %v1524, %v2139
        %v2493 = vsel %vm1539, %v2443, %v2141
        %v2495 = vsel %vm1539, %v1526, %v2143
        %v2497 = vsel %vm1539, %v2445, %v2145
        %v2499 = vsel %vm1539, %v1528, %v2147
        %v2501 = vsel %vm1539, %v2447, %v2149
        %v2503 = vsel %vm1539, %v1530, %v2151
        %v2505 = vsel %vm1539, %v2449, %v2153
        %v2507 = vsel %vm1539, %v1532, %v2155
        %v2509 = vsel %vm1539, %v2451, %v2157
        %v2511 = vsel %vm1539, %v1534, %v2159
        %v2513 = vsel %vm1539, %v2453, %v2161
        %v2515 = vsel %vm1539, %v1536, %v2163
        %v2517 = vsel %vm1539, %v2455, %v2165
        %v2519 = vsel %vm1539, %v1538, %v2167
        %v2521 = vsel %vm1539, %v2457, %v2169
        %v2523 = vsel %vm1539, %v2459, %v2171
        %v2525 = vsel %vm1539, %v2461, %v2173
        %v2527 = vsel %vm1539, %v2463, %v2175
        %v2529 = vsel %vm1539, %v2465, %v2177
        %v2531 = vsel %vm1539, %v2467, %v2179
        %v2533 = vsel %vm1539, %v2469, %v2181
        %v2534 = vsel %vm1572, %v2471, %v1025
        %v2536 = vsel %vm1572, %v2473, %v2186
        %v2537 = vsel %vm1572, %v2475, %v1027
        %v2539 = vsel %vm1572, %v2477, %v2188
        %v2540 = vsel %vm1572, %v2479, %v1029
        %v2542 = vsel %vm1572, %v2481, %v2190
        %v2543 = vsel %vm1572, %v2483, %v1031
        %v2545 = vsel %vm1572, %v2485, %v2192
        %v2546 = vsel %vm1572, %v2487, %v1033
        %v2548 = vsel %vm1572, %v2489, %v2194
        %v2549 = vsel %vm1572, %v2491, %v1035
        %v2551 = vsel %vm1572, %v2493, %v2196
        %v2552 = vsel %vm1572, %v2495, %v1037
        %v2554 = vsel %vm1572, %v2497, %v2198
        %v2555 = vsel %vm1572, %v2499, %v1039
        %v2557 = vsel %vm1572, %v2501, %v2200
        %v2558 = vsel %vm1572, %v2503, %v1041
        %v2560 = vsel %vm1572, %v2505, %v2202
        %v2561 = vsel %vm1572, %v2507, %v1043
        %v2563 = vsel %vm1572, %v2509, %v2204
        %v2564 = vsel %vm1572, %v2511, %v1045
        %v2566 = vsel %vm1572, %v2513, %v2206
        %v2567 = vsel %vm1572, %v2515, %v1047
        %v2569 = vsel %vm1572, %v2517, %v2208
        %v2570 = vsel %vm1572, %v2519, %v1049
        %v2572 = vsel %vm1572, %v2521, %v2210
        %v2574 = vsel %vm1572, %v2523, %v2212
        %v2576 = vsel %vm1572, %v2525, %v2214
        %v2578 = vsel %vm1572, %v2527, %v2216
        %v2580 = vsel %vm1572, %v2529, %v2218
        %v2582 = vsel %vm1572, %v2531, %v2220
        %v2584 = vsel %vm1572, %v2533, %v2222
        %v2585 = vsel %vm1605, %v2534, %v1072
        %v2587 = vsel %vm1605, %v2536, %v2233
        %v2588 = vsel %vm1605, %v2537, %v1074
        %v2590 = vsel %vm1605, %v2539, %v2235
        %v2591 = vsel %vm1605, %v2540, %v1076
        %v2593 = vsel %vm1605, %v2542, %v2237
        %v2594 = vsel %vm1605, %v2543, %v1078
        %v2596 = vsel %vm1605, %v2545, %v2239
        %v2597 = vsel %vm1605, %v2546, %v1080
        %v2599 = vsel %vm1605, %v2548, %v2241
        %v2600 = vsel %vm1605, %v2549, %v1082
        %v2602 = vsel %vm1605, %v2551, %v2243
        %v2603 = vsel %vm1605, %v2552, %v1084
        %v2605 = vsel %vm1605, %v2554, %v2245
        %v2606 = vsel %vm1605, %v2555, %v1086
        %v2608 = vsel %vm1605, %v2557, %v2247
        %v2609 = vsel %vm1605, %v2558, %v1088
        %v2611 = vsel %vm1605, %v2560, %v2249
        %v2612 = vsel %vm1605, %v2561, %v1090
        %v2614 = vsel %vm1605, %v2563, %v2251
        %v2615 = vsel %vm1605, %v2564, %v1092
        %v2617 = vsel %vm1605, %v2566, %v2253
        %v2618 = vsel %vm1605, %v2567, %v1094
        %v2620 = vsel %vm1605, %v2569, %v2255
        %v2621 = vsel %vm1605, %v2570, %v1096
        %v2623 = vsel %vm1605, %v2572, %v2257
        %v2625 = vsel %vm1605, %v2574, %v2259
        %v2627 = vsel %vm1605, %v2576, %v2261
        %v2629 = vsel %vm1605, %v2578, %v2263
        %v2631 = vsel %vm1605, %v2580, %v2265
        %v2633 = vsel %vm1605, %v2582, %v2267
        %v2635 = vsel %vm1605, %v2584, %v2269
        %v2636 = vsel %vm1638, %v2585, %v1107
        %v2638 = vsel %vm1638, %v2587, %v2274
        %v2639 = vsel %vm1638, %v2588, %v1109
        %v2641 = vsel %vm1638, %v2590, %v2276
        %v2642 = vsel %vm1638, %v2591, %v1111
        %v2644 = vsel %vm1638, %v2593, %v2278
        %v2645 = vsel %vm1638, %v2594, %v1113
        %v2647 = vsel %vm1638, %v2596, %v2280
        %v2648 = vsel %vm1638, %v2597, %v1115
        %v2650 = vsel %vm1638, %v2599, %v2282
        %v2651 = vsel %vm1638, %v2600, %v1117
        %v2653 = vsel %vm1638, %v2602, %v2284
        %v2654 = vsel %vm1638, %v2603, %v1119
        %v2656 = vsel %vm1638, %v2605, %v2286
        %v2657 = vsel %vm1638, %v2606, %v1121
        %v2659 = vsel %vm1638, %v2608, %v2288
        %v2660 = vsel %vm1638, %v2609, %v1123
        %v2662 = vsel %vm1638, %v2611, %v2290
        %v2663 = vsel %vm1638, %v2612, %v1125
        %v2665 = vsel %vm1638, %v2614, %v2292
        %v2666 = vsel %vm1638, %v2615, %v1127
        %v2668 = vsel %vm1638, %v2617, %v2294
        %v2669 = vsel %vm1638, %v2618, %v1129
        %v2671 = vsel %vm1638, %v2620, %v2296
        %v2672 = vsel %vm1638, %v2621, %v1131
        %v2674 = vsel %vm1638, %v2623, %v2298
        %v2676 = vsel %vm1638, %v2625, %v2300
        %v2678 = vsel %vm1638, %v2627, %v2302
        %v2680 = vsel %vm1638, %v2629, %v2304
        %v2682 = vsel %vm1638, %v2631, %v2306
        %v2684 = vsel %vm1638, %v2633, %v2308
        %v2686 = vsel %vm1638, %v2635, %v2310
        %v2687 = vsel %vm1671, %v2636, %v1148
        %v2689 = vsel %vm1671, %v2638, %v2319
        %v2690 = vsel %vm1671, %v2639, %v1150
        %v2692 = vsel %vm1671, %v2641, %v2321
        %v2693 = vsel %vm1671, %v2642, %v1152
        %v2695 = vsel %vm1671, %v2644, %v2323
        %v2696 = vsel %vm1671, %v2645, %v1154
        %v2698 = vsel %vm1671, %v2647, %v2325
        %v2699 = vsel %vm1671, %v2648, %v1156
        %v2701 = vsel %vm1671, %v2650, %v2327
        %v2702 = vsel %vm1671, %v2651, %v1158
        %v2704 = vsel %vm1671, %v2653, %v2329
        %v2705 = vsel %vm1671, %v2654, %v1160
        %v2707 = vsel %vm1671, %v2656, %v2331
        %v2708 = vsel %vm1671, %v2657, %v1162
        %v2710 = vsel %vm1671, %v2659, %v2333
        %v2711 = vsel %vm1671, %v2660, %v1164
        %v2713 = vsel %vm1671, %v2662, %v2335
        %v2714 = vsel %vm1671, %v2663, %v1166
        %v2716 = vsel %vm1671, %v2665, %v2337
        %v2717 = vsel %vm1671, %v2666, %v1168
        %v2719 = vsel %vm1671, %v2668, %v2339
        %v2720 = vsel %vm1671, %v2669, %v1170
        %v2722 = vsel %vm1671, %v2671, %v2341
        %v2723 = vsel %vm1671, %v2672, %v1172
        %v2725 = vsel %vm1671, %v2674, %v2343
        %v2727 = vsel %vm1671, %v2676, %v2345
        %v2729 = vsel %vm1671, %v2678, %v2347
        %v2731 = vsel %vm1671, %v2680, %v2349
        %v2733 = vsel %vm1671, %v2682, %v2351
        %v2735 = vsel %vm1671, %v2684, %v2353
        %v2737 = vsel %vm1671, %v2686, %v2355
        %v2739 = vsel %vm1704, %v2687, 0
        %v2740 = vsel %vm1704, %v2689, 0
        %v2741 = vsel %vm1704, %v2690, 0
        %v2742 = vsel %vm1704, %v2692, 0
        %v2743 = vsel %vm1704, %v2693, 0
        %v2744 = vsel %vm1704, %v2695, 0
        %v2745 = vsel %vm1704, %v2696, 0
        %v2746 = vsel %vm1704, %v2698, 0
        %v2747 = vsel %vm1704, %v2699, 0
        %v2748 = vsel %vm1704, %v2701, 0
        %v2749 = vsel %vm1704, %v2702, 0
        %v2750 = vsel %vm1704, %v2704, 0
        %v2751 = vsel %vm1704, %v2705, 0
        %v2752 = vsel %vm1704, %v2707, 0
        %v2753 = vsel %vm1704, %v2708, 0
        %v2754 = vsel %vm1704, %v2710, 0
        %v2755 = vsel %vm1704, %v2711, 0
        %v2756 = vsel %vm1704, %v2713, 0
        %v2757 = vsel %vm1704, %v2714, 0
        %v2758 = vsel %vm1704, %v2716, 0
        %v2759 = vsel %vm1704, %v2717, 0
        %v2760 = vsel %vm1704, %v2719, 0
        %v2761 = vsel %vm1704, %v2720, 0
        %v2762 = vsel %vm1704, %v2722, 0
        %v2763 = vsel %vm1704, %v2723, 0
        %v2764 = vsel %vm1704, %v2725, 0
        %v2765 = vsel %vm1704, %v2727, 0
        %v2766 = vsel %vm1704, %v2729, 0
        %v2767 = vsel %vm1704, %v2731, 0
        %v2768 = vsel %vm1704, %v2733, 0
        %v2769 = vsel %vm1704, %v2735, 0
        %v2770 = vsel %vm1704, %v2737, 0
        %v2771 = vshrl.u32 %v2739, 16
        %v2773 = vshll.u32 %v2739, 16
        %v2775 = vrot.slane %v2773, 1
        %v2776 = vor.u32 %v2771, %v2775
        %v2777 = vshll.u32 %v2740, 16
        %v2779 = vrot.slane %v2777, 1
        %v2780 = vsel %vm449, %v2776, %v2779
        %v2781 = vshrl.u32 %v2741, 16
        %v2783 = vshll.u32 %v2741, 16
        %v2785 = vrot.slane %v2783, 1
        %v2786 = vor.u32 %v2781, %v2785
        %v2787 = vshll.u32 %v2742, 16
        %v2789 = vrot.slane %v2787, 1
        %v2790 = vsel %vm449, %v2786, %v2789
        %v2791 = vshrl.u32 %v2743, 16
        %v2793 = vshll.u32 %v2743, 16
        %v2795 = vrot.slane %v2793, 1
        %v2796 = vor.u32 %v2791, %v2795
        %v2797 = vshll.u32 %v2744, 16
        %v2799 = vrot.slane %v2797, 1
        %v2800 = vsel %vm449, %v2796, %v2799
        %v2801 = vshrl.u32 %v2745, 16
        %v2803 = vshll.u32 %v2745, 16
        %v2805 = vrot.slane %v2803, 1
        %v2806 = vor.u32 %v2801, %v2805
        %v2807 = vshll.u32 %v2746, 16
        %v2809 = vrot.slane %v2807, 1
        %v2810 = vsel %vm449, %v2806, %v2809
        %v2811 = vshrl.u32 %v2747, 16
        %v2813 = vshll.u32 %v2747, 16
        %v2815 = vrot.slane %v2813, 1
        %v2816 = vor.u32 %v2811, %v2815
        %v2817 = vshll.u32 %v2748, 16
        %v2819 = vrot.slane %v2817, 1
        %v2820 = vsel %vm449, %v2816, %v2819
        %v2821 = vshrl.u32 %v2749, 16
        %v2823 = vshll.u32 %v2749, 16
        %v2825 = vrot.slane %v2823, 1
        %v2826 = vor.u32 %v2821, %v2825
        %v2827 = vshll.u32 %v2750, 16
        %v2829 = vrot.slane %v2827, 1
        %v2830 = vsel %vm449, %v2826, %v2829
        %v2831 = vshrl.u32 %v2751, 16
        %v2833 = vshll.u32 %v2751, 16
        %v2835 = vrot.slane %v2833, 1
        %v2836 = vor.u32 %v2831, %v2835
        %v2837 = vshll.u32 %v2752, 16
        %v2839 = vrot.slane %v2837, 1
        %v2840 = vsel %vm449, %v2836, %v2839
        %v2841 = vshrl.u32 %v2753, 16
        %v2843 = vshll.u32 %v2753, 16
        %v2845 = vrot.slane %v2843, 1
        %v2846 = vor.u32 %v2841, %v2845
        %v2847 = vshll.u32 %v2754, 16
        %v2849 = vrot.slane %v2847, 1
        %v2850 = vsel %vm449, %v2846, %v2849
        %v2851 = vshrl.u32 %v2755, 16
        %v2853 = vshll.u32 %v2755, 16
        %v2855 = vrot.slane %v2853, 1
        %v2856 = vor.u32 %v2851, %v2855
        %v2857 = vshll.u32 %v2756, 16
        %v2859 = vrot.slane %v2857, 1
        %v2860 = vsel %vm449, %v2856, %v2859
        %v2861 = vshrl.u32 %v2757, 16
        %v2863 = vshll.u32 %v2757, 16
        %v2865 = vrot.slane %v2863, 1
        %v2866 = vor.u32 %v2861, %v2865
        %v2867 = vshll.u32 %v2758, 16
        %v2869 = vrot.slane %v2867, 1
        %v2870 = vsel %vm449, %v2866, %v2869
        %v2871 = vshrl.u32 %v2759, 16
        %v2873 = vshll.u32 %v2759, 16
        %v2875 = vrot.slane %v2873, 1
        %v2876 = vor.u32 %v2871, %v2875
        %v2877 = vshll.u32 %v2760, 16
        %v2879 = vrot.slane %v2877, 1
        %v2880 = vsel %vm449, %v2876, %v2879
        %v2881 = vshrl.u32 %v2761, 16
        %v2883 = vshll.u32 %v2761, 16
        %v2885 = vrot.slane %v2883, 1
        %v2886 = vor.u32 %v2881, %v2885
        %v2887 = vshll.u32 %v2762, 16
        %v2889 = vrot.slane %v2887, 1
        %v2890 = vsel %vm449, %v2886, %v2889
        %v2891 = vshrl.u32 %v2763, 16
        %v2893 = vshll.u32 %v2763, 16
        %v2895 = vrot.slane %v2893, 1
        %v2896 = vor.u32 %v2891, %v2895
        %v2897 = vshll.u32 %v2764, 16
        %v2899 = vrot.slane %v2897, 1
        %v2900 = vsel %vm449, %v2896, %v2899
        %v2901 = vshrl.u32 %v2765, 16
        %v2903 = vshll.u32 %v2765, 16
        %v2905 = vrot.slane %v2903, 1
        %v2906 = vor.u32 %v2901, %v2905
        %v2907 = vshll.u32 %v2766, 16
        %v2909 = vrot.slane %v2907, 1
        %v2910 = vsel %vm449, %v2906, %v2909
        %v2911 = vshrl.u32 %v2767, 16
        %v2913 = vshll.u32 %v2767, 16
        %v2915 = vrot.slane %v2913, 1
        %v2916 = vor.u32 %v2911, %v2915
        %v2917 = vshll.u32 %v2768, 16
        %v2919 = vrot.slane %v2917, 1
        %v2920 = vsel %vm449, %v2916, %v2919
        %v2921 = vshrl.u32 %v2769, 16
        %v2923 = vshll.u32 %v2769, 16
        %v2925 = vrot.slane %v2923, 1
        %v2926 = vor.u32 %v2921, %v2925
        %v2927 = vshll.u32 %v2770, 16
        %v2929 = vrot.slane %v2927, 1
        %v2930 = vsel %vm449, %v2926, %v2929
        %2931 = vrot.lane.b32.xlu0 %v2780, 64
        %v2932 = vpop.permute.xlu0 %2931
        %2933 = vrot.lane.b32.xlu0 %v2790, 64
        %v2934 = vpop.permute.xlu0 %2933
        %2935 = vrot.lane.b32.xlu0 %v2800, 64
        %v2936 = vpop.permute.xlu0 %2935
        %2937 = vrot.lane.b32.xlu0 %v2810, 64
        %v2938 = vpop.permute.xlu0 %2937
        %2939 = vrot.lane.b32.xlu0 %v2820, 64
        %v2940 = vpop.permute.xlu0 %2939
        %2941 = vrot.lane.b32.xlu0 %v2830, 64
        %v2942 = vpop.permute.xlu0 %2941
        %2943 = vrot.lane.b32.xlu0 %v2840, 64
        %v2944 = vpop.permute.xlu0 %2943
        %2945 = vrot.lane.b32.xlu0 %v2850, 64
        %v2946 = vpop.permute.xlu0 %2945
        %2947 = vrot.lane.b32.xlu0 %v2860, 64
        %v2948 = vpop.permute.xlu0 %2947
        %2949 = vrot.lane.b32.xlu0 %v2870, 64
        %v2950 = vpop.permute.xlu0 %2949
        %2951 = vrot.lane.b32.xlu0 %v2880, 64
        %v2952 = vpop.permute.xlu0 %2951
        %2953 = vrot.lane.b32.xlu0 %v2890, 64
        %v2954 = vpop.permute.xlu0 %2953
        %2955 = vrot.lane.b32.xlu0 %v2900, 64
        %v2956 = vpop.permute.xlu0 %2955
        %2957 = vrot.lane.b32.xlu0 %v2910, 64
        %v2958 = vpop.permute.xlu0 %2957
        %2959 = vrot.lane.b32.xlu0 %v2920, 64
        %v2960 = vpop.permute.xlu0 %2959
        %2961 = vrot.lane.b32.xlu0 %v2930, 64
        %v2962 = vpop.permute.xlu0 %2961
        %vm2963 = vcmask 523264
        %v2965 = vsel %vm2963, %v1904, %v2932
        %v2968 = vsel %vm2963, %v1906, %v2934
        %v2971 = vsel %vm2963, %v1908, %v2936
        %v2974 = vsel %vm2963, %v1910, %v2938
        %v2977 = vsel %vm2963, %v1912, %v2940
        %v2980 = vsel %vm2963, %v1914, %v2942
        %v2983 = vsel %vm2963, %v1916, %v2944
        %v2986 = vsel %vm2963, %v1918, %v2946
        %v2989 = vsel %vm2963, %v1920, %v2948
        %v2992 = vsel %vm2963, %v1922, %v2950
        %v2995 = vsel %vm2963, %v1924, %v2952
        %v2998 = vsel %vm2963, %v1926, %v2954
        %v3001 = vsel %vm2963, %v1928, %v2956
        %v3004 = vsel %vm2963, %v1930, %v2958
        %v3007 = vsel %vm2963, %v1932, %v2960
        %v3010 = vsel %vm2963, %v1934, %v2962
        %v3012 = vld [vmem:[%s1] sm:$0xf]
        %v3013 = vld [vmem:[%s1 + $0x4] sm:$0xf]
        %v3014 = vld [vmem:[%s1 + $0x8] sm:$0xf]
        %v3015 = vld [vmem:[%s1 + $0xc] sm:$0xf]
        %v3016 = vld [vmem:[%s1 + $0x10] sm:$0xf]
        %v3017 = vld [vmem:[%s1 + $0x14] sm:$0xf]
        %v3018 = vld [vmem:[%s1 + $0x18] sm:$0xf]
        %v3019 = vld [vmem:[%s1 + $0x1c] sm:$0xf]
        %v3020 = vld [vmem:[%s1 + $0x20] sm:$0xf]
        %v3021 = vld [vmem:[%s1 + $0x24] sm:$0xf]
        %v3022 = vld [vmem:[%s1 + $0x28] sm:$0xf]
        %v3023 = vld [vmem:[%s1 + $0x2c] sm:$0xf]
        %v3024 = vld [vmem:[%s1 + $0x30] sm:$0xf]
        %v3025 = vld [vmem:[%s1 + $0x34] sm:$0xf]
        %v3026 = vld [vmem:[%s1 + $0x38] sm:$0xf]
        %v3027 = vld [vmem:[%s1 + $0x3c] sm:$0xf]
        %v3044 = vunpack.c.l.b16 %v3012
        %v3045 = vunpack.c.l.b16 %v3013
        %v3046 = vunpack.c.l.b16 %v3014
        %v3047 = vunpack.c.l.b16 %v3015
        %v3048 = vunpack.c.l.b16 %v3016
        %v3049 = vunpack.c.l.b16 %v3017
        %v3050 = vunpack.c.l.b16 %v3018
        %v3051 = vunpack.c.l.b16 %v3019
        %v3052 = vunpack.c.l.b16 %v3020
        %v3053 = vunpack.c.l.b16 %v3021
        %v3054 = vunpack.c.l.b16 %v3022
        %v3055 = vunpack.c.l.b16 %v3023
        %v3056 = vunpack.c.l.b16 %v3024
        %v3057 = vunpack.c.l.b16 %v3025
        %v3058 = vunpack.c.l.b16 %v3026
        %v3059 = vunpack.c.l.b16 %v3027
        %v3060 = vpack.c.b16 %v3045, %v3044
        %v3061 = vpack.c.b16 %v3047, %v3046
        %v3062 = vpack.c.b16 %v3049, %v3048
        %v3063 = vpack.c.b16 %v3051, %v3050
        %v3064 = vpack.c.b16 %v3053, %v3052
        %v3065 = vpack.c.b16 %v3055, %v3054
        %v3066 = vpack.c.b16 %v3057, %v3056
        %v3067 = vpack.c.b16 %v3059, %v3058
        %3076 = vmatprep.subr.bf16.mxu0 0
        %3077 = vmatpush1.bf16.msra.mxu0 %v3067
        %3078 = vmatprep.subr.bf16.mxu0 0
        %3079 = vmatpush1.bf16.msra.mxu0 %v3066
        %3080 = vmatprep.subr.bf16.mxu0 0
        %3081 = vmatpush1.bf16.msra.mxu0 %v3065
        %3082 = vmatprep.subr.bf16.mxu0 0
        %3083 = vmatpush1.bf16.msra.mxu0 %v3064
        %3084 = vmatprep.subr.bf16.mxu0 0
        %3085 = vmatpush1.bf16.msra.mxu0 %v3063
        %3086 = vmatprep.subr.bf16.mxu0 0
        %3087 = vmatpush1.bf16.msra.mxu0 %v3062
        %3088 = vmatprep.subr.bf16.mxu0 0
        %3089 = vmatpush1.bf16.msra.mxu0 %v3061
        %3090 = vmatprep.subr.bf16.mxu0 0
        %3091 = vmatpush1.bf16.msra.mxu0 %v3060
        %3092 = vmatprep.subr.bf16.mxu0 0
        %3093 = vmatpush2.bf16.msra.mxu0 0
        %3094 = vmatprep.subr.bf16.mxu0 0
        %3095 = vmatpush2.bf16.msra.mxu0 0
        %3096 = vmatprep.subr.bf16.mxu0 0
        %3097 = vmatpush2.bf16.msra.mxu0 0
        %3098 = vmatprep.subr.bf16.mxu0 0
        %3099 = vmatpush2.bf16.msra.mxu0 0
        %3100 = vmatprep.subr.bf16.mxu0 0
        %3101 = vmatpush2.bf16.msra.mxu0 0
        %3102 = vmatprep.subr.bf16.mxu0 0
        %3103 = vmatpush2.bf16.msra.mxu0 0
        %3104 = vmatprep.subr.bf16.mxu0 0
        %3105 = vmatpush2.bf16.msra.mxu0 0
        %3106 = vmatprep.subr.bf16.mxu0 0
        %3107 = vmatpush2.bf16.msra.mxu0 0
        %3108 = vmatprep.mubr.bf16.mxu0 0
        %3109 = vmatmul.mubr.bf16.gmra.mxu0 %v2965
        %v3110 = vpop.f32.mrf.mxu0
        %v3111 = vadd.f32 0.0, %v3110
        %v3112 = vpop.f32.mrf.mxu0
        %v3113 = vpop.f32.mrf.mxu0
        %v3114 = vadd.f32 0.0, %v3113
        %v3115 = vpop.f32.mrf.mxu0
        %3116 = vmatprep.mubr.bf16.mxu0 0
        %3117 = vmatmul.mubr.bf16.gmra.mxu0 %v2968
        %v3118 = vpop.f32.mrf.mxu0
        %v3119 = vadd.f32 0.0, %v3118
        %v3120 = vpop.f32.mrf.mxu0
        %v3121 = vpop.f32.mrf.mxu0
        %v3122 = vadd.f32 0.0, %v3121
        %v3123 = vpop.f32.mrf.mxu0
        %3124 = vmatprep.mubr.bf16.mxu0 0
        %3125 = vmatmul.mubr.bf16.gmra.mxu0 %v2971
        %v3126 = vpop.f32.mrf.mxu0
        %v3127 = vadd.f32 0.0, %v3126
        %v3128 = vpop.f32.mrf.mxu0
        %v3129 = vpop.f32.mrf.mxu0
        %v3130 = vadd.f32 0.0, %v3129
        %v3131 = vpop.f32.mrf.mxu0
        %3132 = vmatprep.mubr.bf16.mxu0 0
        %3133 = vmatmul.mubr.bf16.gmra.mxu0 %v2974
        %v3134 = vpop.f32.mrf.mxu0
        %v3135 = vadd.f32 0.0, %v3134
        %v3136 = vpop.f32.mrf.mxu0
        %v3137 = vpop.f32.mrf.mxu0
        %v3138 = vadd.f32 0.0, %v3137
        %v3139 = vpop.f32.mrf.mxu0
        %3140 = vmatprep.mubr.bf16.mxu0 0
        %3141 = vmatmul.mubr.bf16.gmra.mxu0 %v2977
        %v3142 = vpop.f32.mrf.mxu0
        %v3143 = vadd.f32 0.0, %v3142
        %v3144 = vpop.f32.mrf.mxu0
        %v3145 = vpop.f32.mrf.mxu0
        %v3146 = vadd.f32 0.0, %v3145
        %v3147 = vpop.f32.mrf.mxu0
        %3148 = vmatprep.mubr.bf16.mxu0 0
        %3149 = vmatmul.mubr.bf16.gmra.mxu0 %v2980
        %v3150 = vpop.f32.mrf.mxu0
        %v3151 = vadd.f32 0.0, %v3150
        %v3152 = vpop.f32.mrf.mxu0
        %v3153 = vpop.f32.mrf.mxu0
        %v3154 = vadd.f32 0.0, %v3153
        %v3155 = vpop.f32.mrf.mxu0
        %3156 = vmatprep.mubr.bf16.mxu0 0
        %3157 = vmatmul.mubr.bf16.gmra.mxu0 %v2983
        %v3158 = vpop.f32.mrf.mxu0
        %v3159 = vadd.f32 0.0, %v3158
        %v3160 = vpop.f32.mrf.mxu0
        %v3161 = vpop.f32.mrf.mxu0
        %v3162 = vadd.f32 0.0, %v3161
        %v3163 = vpop.f32.mrf.mxu0
        %3164 = vmatprep.mubr.bf16.mxu0 0
        %3165 = vmatmul.mubr.bf16.gmra.mxu0 %v2986
        %v3166 = vpop.f32.mrf.mxu0
        %v3167 = vadd.f32 0.0, %v3166
        %v3168 = vpop.f32.mrf.mxu0
        %v3169 = vpop.f32.mrf.mxu0
        %v3170 = vadd.f32 0.0, %v3169
        %v3171 = vpop.f32.mrf.mxu0
        %3172 = vmatprep.mubr.bf16.mxu0 0
        %3173 = vmatmul.mubr.bf16.gmra.mxu0 %v2989
        %v3174 = vpop.f32.mrf.mxu0
        %v3175 = vadd.f32 0.0, %v3174
        %v3176 = vpop.f32.mrf.mxu0
        %v3177 = vpop.f32.mrf.mxu0
        %v3178 = vadd.f32 0.0, %v3177
        %v3179 = vpop.f32.mrf.mxu0
        %3180 = vmatprep.mubr.bf16.mxu0 0
        %3181 = vmatmul.mubr.bf16.gmra.mxu0 %v2992
        %v3182 = vpop.f32.mrf.mxu0
        %v3183 = vadd.f32 0.0, %v3182
        %v3184 = vpop.f32.mrf.mxu0
        %v3185 = vpop.f32.mrf.mxu0
        %v3186 = vadd.f32 0.0, %v3185
        %v3187 = vpop.f32.mrf.mxu0
        %3188 = vmatprep.mubr.bf16.mxu0 0
        %3189 = vmatmul.mubr.bf16.gmra.mxu0 %v2995
        %v3190 = vpop.f32.mrf.mxu0
        %v3191 = vadd.f32 0.0, %v3190
        %v3192 = vpop.f32.mrf.mxu0
        %v3193 = vpop.f32.mrf.mxu0
        %v3194 = vadd.f32 0.0, %v3193
        %v3195 = vpop.f32.mrf.mxu0
        %3196 = vmatprep.mubr.bf16.mxu0 0
        %3197 = vmatmul.mubr.bf16.gmra.mxu0 %v2998
        %v3198 = vpop.f32.mrf.mxu0
        %v3199 = vadd.f32 0.0, %v3198
        %v3200 = vpop.f32.mrf.mxu0
        %v3201 = vpop.f32.mrf.mxu0
        %v3202 = vadd.f32 0.0, %v3201
        %v3203 = vpop.f32.mrf.mxu0
        %3204 = vmatprep.mubr.bf16.mxu0 0
        %3205 = vmatmul.mubr.bf16.gmra.mxu0 %v3001
        %v3206 = vpop.f32.mrf.mxu0
        %v3207 = vadd.f32 0.0, %v3206
        %v3208 = vpop.f32.mrf.mxu0
        %v3209 = vpop.f32.mrf.mxu0
        %v3210 = vadd.f32 0.0, %v3209
        %v3211 = vpop.f32.mrf.mxu0
        %3212 = vmatprep.mubr.bf16.mxu0 0
        %3213 = vmatmul.mubr.bf16.gmra.mxu0 %v3004
        %v3214 = vpop.f32.mrf.mxu0
        %v3215 = vadd.f32 0.0, %v3214
        %v3216 = vpop.f32.mrf.mxu0
        %v3217 = vpop.f32.mrf.mxu0
        %v3218 = vadd.f32 0.0, %v3217
        %v3219 = vpop.f32.mrf.mxu0
        %3220 = vmatprep.mubr.bf16.mxu0 0
        %3221 = vmatmul.mubr.bf16.gmra.mxu0 %v3007
        %v3222 = vpop.f32.mrf.mxu0
        %v3223 = vadd.f32 0.0, %v3222
        %v3224 = vpop.f32.mrf.mxu0
        %v3225 = vpop.f32.mrf.mxu0
        %v3226 = vadd.f32 0.0, %v3225
        %v3227 = vpop.f32.mrf.mxu0
        %3228 = vmatprep.mubr.bf16.mxu0 0
        %3229 = vmatmul.mubr.bf16.gmra.mxu0 %v3010
        %v3230 = vpop.f32.mrf.mxu0
        %v3231 = vadd.f32 0.0, %v3230
        %v3232 = vpop.f32.mrf.mxu0
        %v3233 = vpop.f32.mrf.mxu0
        %v3234 = vadd.f32 0.0, %v3233
        %v3235 = vpop.f32.mrf.mxu0
        %3236 = vdwg.mxu0
        %v3237 = vadd.f32 %v3111, %v3114
        %v3238 = vadd.f32 %v3237, %v3119
        %v3239 = vadd.f32 %v3238, %v3122
        %v3240 = vadd.f32 %v3239, %v3127
        %v3241 = vadd.f32 %v3240, %v3130
        %v3242 = vadd.f32 %v3241, %v3135
        %v3243 = vadd.f32 %v3242, %v3138
        %v3244 = vadd.f32 %v3243, %v3143
        %v3245 = vadd.f32 %v3244, %v3146
        %v3246 = vadd.f32 %v3245, %v3151
        %v3247 = vadd.f32 %v3246, %v3154
        %v3248 = vadd.f32 %v3247, %v3159
        %v3249 = vadd.f32 %v3248, %v3162
        %v3250 = vadd.f32 %v3249, %v3167
        %v3251 = vadd.f32 %v3250, %v3170
        %v3252 = vadd.f32 %v3251, %v3175
        %v3253 = vadd.f32 %v3252, %v3178
        %v3254 = vadd.f32 %v3253, %v3183
        %v3255 = vadd.f32 %v3254, %v3186
        %v3256 = vadd.f32 %v3255, %v3191
        %v3257 = vadd.f32 %v3256, %v3194
        %v3258 = vadd.f32 %v3257, %v3199
        %v3259 = vadd.f32 %v3258, %v3202
        %v3260 = vadd.f32 %v3259, %v3207
        %v3261 = vadd.f32 %v3260, %v3210
        %v3262 = vadd.f32 %v3261, %v3215
        %v3263 = vadd.f32 %v3262, %v3218
        %v3264 = vadd.f32 %v3263, %v3223
        %v3265 = vadd.f32 %v3264, %v3226
        %v3266 = vadd.f32 %v3265, %v3231
        %v3267 = vadd.f32 %v3266, %v3234
        %v3268 = vrot.slane %v3267, 4
        %v3269 = vadd.f32 %v3267, %v3268
        %v3270 = vrot.slane %v3269, 2
        %v3271 = vadd.f32 %v3269, %v3270
        %v3272 = vrot.slane %v3271, 1
        %v3273 = vadd.f32 %v3271, %v3272
        %3274 = vst [vmem:[%s233] sm:$0x1] %v3273
        %v3275 = vmul.f32 %v3111, %v3111
        %v3276 = vmul.f32 %v3114, %v3114
        %v3277 = vmul.f32 %v3119, %v3119
        %v3278 = vmul.f32 %v3122, %v3122
        %v3279 = vmul.f32 %v3127, %v3127
        %v3280 = vmul.f32 %v3130, %v3130
        %v3281 = vmul.f32 %v3135, %v3135
        %v3282 = vmul.f32 %v3138, %v3138
        %v3283 = vmul.f32 %v3143, %v3143
        %v3284 = vmul.f32 %v3146, %v3146
        %v3285 = vmul.f32 %v3151, %v3151
        %v3286 = vmul.f32 %v3154, %v3154
        %v3287 = vmul.f32 %v3159, %v3159
        %v3288 = vmul.f32 %v3162, %v3162
        %v3289 = vmul.f32 %v3167, %v3167
        %v3290 = vmul.f32 %v3170, %v3170
        %v3291 = vmul.f32 %v3175, %v3175
        %v3292 = vmul.f32 %v3178, %v3178
        %v3293 = vmul.f32 %v3183, %v3183
        %v3294 = vmul.f32 %v3186, %v3186
        %v3295 = vmul.f32 %v3191, %v3191
        %v3296 = vmul.f32 %v3194, %v3194
        %v3297 = vmul.f32 %v3199, %v3199
        %v3298 = vmul.f32 %v3202, %v3202
        %v3299 = vmul.f32 %v3207, %v3207
        %v3300 = vmul.f32 %v3210, %v3210
        %v3301 = vmul.f32 %v3215, %v3215
        %v3302 = vmul.f32 %v3218, %v3218
        %v3303 = vmul.f32 %v3223, %v3223
        %v3304 = vmul.f32 %v3226, %v3226
        %v3305 = vmul.f32 %v3231, %v3231
        %v3306 = vmul.f32 %v3234, %v3234
        %v3307 = vadd.f32 %v3275, %v3276
        %v3308 = vadd.f32 %v3307, %v3277
        %v3309 = vadd.f32 %v3308, %v3278
        %v3310 = vadd.f32 %v3309, %v3279
        %v3311 = vadd.f32 %v3310, %v3280
        %v3312 = vadd.f32 %v3311, %v3281
        %v3313 = vadd.f32 %v3312, %v3282
        %v3314 = vadd.f32 %v3313, %v3283
        %v3315 = vadd.f32 %v3314, %v3284
        %v3316 = vadd.f32 %v3315, %v3285
        %v3317 = vadd.f32 %v3316, %v3286
        %v3318 = vadd.f32 %v3317, %v3287
        %v3319 = vadd.f32 %v3318, %v3288
        %v3320 = vadd.f32 %v3319, %v3289
        %v3321 = vadd.f32 %v3320, %v3290
        %v3322 = vadd.f32 %v3321, %v3291
        %v3323 = vadd.f32 %v3322, %v3292
        %v3324 = vadd.f32 %v3323, %v3293
        %v3325 = vadd.f32 %v3324, %v3294
        %v3326 = vadd.f32 %v3325, %v3295
        %v3327 = vadd.f32 %v3326, %v3296
        %v3328 = vadd.f32 %v3327, %v3297
        %v3329 = vadd.f32 %v3328, %v3298
        %v3330 = vadd.f32 %v3329, %v3299
        %v3331 = vadd.f32 %v3330, %v3300
        %v3332 = vadd.f32 %v3331, %v3301
        %v3333 = vadd.f32 %v3332, %v3302
        %v3334 = vadd.f32 %v3333, %v3303
        %v3335 = vadd.f32 %v3334, %v3304
        %v3336 = vadd.f32 %v3335, %v3305
        %v3337 = vadd.f32 %v3336, %v3306
        %v3338 = vrot.slane %v3337, 4
        %v3339 = vadd.f32 %v3337, %v3338
        %v3340 = vrot.slane %v3339, 2
        %v3341 = vadd.f32 %v3339, %v3340
        %v3342 = vrot.slane %v3341, 1
        %v3343 = vadd.f32 %v3341, %v3342
        %3344 = vst [vmem:[%s239] sm:$0x1] %v3343
        %v3345 = vpack.c.bf16 %v3114, %v3111
        %v3346 = vpack.c.bf16 %v3122, %v3119
        %v3347 = vpack.c.bf16 %v3130, %v3127
        %v3348 = vpack.c.bf16 %v3138, %v3135
        %v3349 = vpack.c.bf16 %v3146, %v3143
        %v3350 = vpack.c.bf16 %v3154, %v3151
        %v3351 = vpack.c.bf16 %v3162, %v3159
        %v3352 = vpack.c.bf16 %v3170, %v3167
        %v3353 = vpack.c.bf16 %v3178, %v3175
        %v3354 = vpack.c.bf16 %v3186, %v3183
        %v3355 = vpack.c.bf16 %v3194, %v3191
        %v3356 = vpack.c.bf16 %v3202, %v3199
        %v3357 = vpack.c.bf16 %v3210, %v3207
        %v3358 = vpack.c.bf16 %v3218, %v3215
        %v3359 = vpack.c.bf16 %v3226, %v3223
        %v3360 = vpack.c.bf16 %v3234, %v3231
        %v3377 = vunpack.c.l.b16 %v3345
        %v3378 = vunpack.c.h.b16 %v3345
        %v3379 = vunpack.c.l.b16 %v3346
        %v3380 = vunpack.c.h.b16 %v3346
        %v3381 = vunpack.c.l.b16 %v3347
        %v3382 = vunpack.c.h.b16 %v3347
        %v3383 = vunpack.c.l.b16 %v3348
        %v3384 = vunpack.c.h.b16 %v3348
        %v3385 = vunpack.c.l.b16 %v3349
        %v3386 = vunpack.c.h.b16 %v3349
        %v3387 = vunpack.c.l.b16 %v3350
        %v3388 = vunpack.c.h.b16 %v3350
        %v3389 = vunpack.c.l.b16 %v3351
        %v3390 = vunpack.c.h.b16 %v3351
        %v3391 = vunpack.c.l.b16 %v3352
        %v3392 = vunpack.c.h.b16 %v3352
        %v3393 = vunpack.c.l.b16 %v3353
        %v3394 = vunpack.c.h.b16 %v3353
        %v3395 = vunpack.c.l.b16 %v3354
        %v3396 = vunpack.c.h.b16 %v3354
        %v3397 = vunpack.c.l.b16 %v3355
        %v3398 = vunpack.c.h.b16 %v3355
        %v3399 = vunpack.c.l.b16 %v3356
        %v3400 = vunpack.c.h.b16 %v3356
        %v3401 = vunpack.c.l.b16 %v3357
        %v3402 = vunpack.c.h.b16 %v3357
        %v3403 = vunpack.c.l.b16 %v3358
        %v3404 = vunpack.c.h.b16 %v3358
        %v3405 = vunpack.c.l.b16 %v3359
        %v3406 = vunpack.c.h.b16 %v3359
        %v3407 = vunpack.c.l.b16 %v3360
        %v3408 = vunpack.c.h.b16 %v3360
        %v3409 = vpack.c.b16 %v3377, %v3377
        %v3410 = vpack.c.b16 %v3378, %v3378
        %v3411 = vpack.c.b16 %v3379, %v3379
        %v3412 = vpack.c.b16 %v3380, %v3380
        %v3413 = vpack.c.b16 %v3381, %v3381
        %v3414 = vpack.c.b16 %v3382, %v3382
        %v3415 = vpack.c.b16 %v3383, %v3383
        %v3416 = vpack.c.b16 %v3384, %v3384
        %v3417 = vpack.c.b16 %v3385, %v3385
        %v3418 = vpack.c.b16 %v3386, %v3386
        %v3419 = vpack.c.b16 %v3387, %v3387
        %v3420 = vpack.c.b16 %v3388, %v3388
        %v3421 = vpack.c.b16 %v3389, %v3389
        %v3422 = vpack.c.b16 %v3390, %v3390
        %v3423 = vpack.c.b16 %v3391, %v3391
        %v3424 = vpack.c.b16 %v3392, %v3392
        %v3425 = vpack.c.b16 %v3393, %v3393
        %v3426 = vpack.c.b16 %v3394, %v3394
        %v3427 = vpack.c.b16 %v3395, %v3395
        %v3428 = vpack.c.b16 %v3396, %v3396
        %v3429 = vpack.c.b16 %v3397, %v3397
        %v3430 = vpack.c.b16 %v3398, %v3398
        %v3431 = vpack.c.b16 %v3399, %v3399
        %v3432 = vpack.c.b16 %v3400, %v3400
        %v3433 = vpack.c.b16 %v3401, %v3401
        %v3434 = vpack.c.b16 %v3402, %v3402
        %v3435 = vpack.c.b16 %v3403, %v3403
        %v3436 = vpack.c.b16 %v3404, %v3404
        %v3437 = vpack.c.b16 %v3405, %v3405
        %v3438 = vpack.c.b16 %v3406, %v3406
        %v3439 = vpack.c.b16 %v3407, %v3407
        %v3440 = vpack.c.b16 %v3408, %v3408
        %vm3473 = vcmask 60416
        %3474 = vst.msk [vmem:[%s258] sm:$0xf] %vm3473, %v3409
        %3475 = vst.msk [vmem:[%s258 + $0x4] sm:$0xf] %vm3473, %v3410
        %3476 = vst.msk [vmem:[%s258 + $0x8] sm:$0xf] %vm3473, %v3411
        %3477 = vst.msk [vmem:[%s258 + $0xc] sm:$0xf] %vm3473, %v3412
        %3478 = vst.msk [vmem:[%s258 + $0x10] sm:$0xf] %vm3473, %v3413
        %3479 = vst.msk [vmem:[%s258 + $0x14] sm:$0xf] %vm3473, %v3414
        %3480 = vst.msk [vmem:[%s258 + $0x18] sm:$0xf] %vm3473, %v3415
        %3481 = vst.msk [vmem:[%s258 + $0x1c] sm:$0xf] %vm3473, %v3416
        %3482 = vst.msk [vmem:[%s258 + $0x20] sm:$0xf] %vm3473, %v3417
        %3483 = vst.msk [vmem:[%s258 + $0x24] sm:$0xf] %vm3473, %v3418
        %3484 = vst.msk [vmem:[%s258 + $0x28] sm:$0xf] %vm3473, %v3419
        %3485 = vst.msk [vmem:[%s258 + $0x2c] sm:$0xf] %vm3473, %v3420
        %3486 = vst.msk [vmem:[%s258 + $0x30] sm:$0xf] %vm3473, %v3421
        %3487 = vst.msk [vmem:[%s258 + $0x34] sm:$0xf] %vm3473, %v3422
        %3488 = vst.msk [vmem:[%s258 + $0x38] sm:$0xf] %vm3473, %v3423
        %3489 = vst.msk [vmem:[%s258 + $0x3c] sm:$0xf] %vm3473, %v3424
        %3490 = vst.msk [vmem:[%s258 + $0x40] sm:$0xf] %vm3473, %v3425
        %3491 = vst.msk [vmem:[%s258 + $0x44] sm:$0xf] %vm3473, %v3426
        %3492 = vst.msk [vmem:[%s258 + $0x48] sm:$0xf] %vm3473, %v3427
        %3493 = vst.msk [vmem:[%s258 + $0x4c] sm:$0xf] %vm3473, %v3428
        %3494 = vst.msk [vmem:[%s258 + $0x50] sm:$0xf] %vm3473, %v3429
        %3495 = vst.msk [vmem:[%s258 + $0x54] sm:$0xf] %vm3473, %v3430
        %3496 = vst.msk [vmem:[%s258 + $0x58] sm:$0xf] %vm3473, %v3431
        %3497 = vst.msk [vmem:[%s258 + $0x5c] sm:$0xf] %vm3473, %v3432
        %3498 = vst.msk [vmem:[%s258 + $0x60] sm:$0xf] %vm3473, %v3433
        %3499 = vst.msk [vmem:[%s258 + $0x64] sm:$0xf] %vm3473, %v3434
        %3500 = vst.msk [vmem:[%s258 + $0x68] sm:$0xf] %vm3473, %v3435
        %3501 = vst.msk [vmem:[%s258 + $0x6c] sm:$0xf] %vm3473, %v3436
        %3502 = vst.msk [vmem:[%s258 + $0x70] sm:$0xf] %vm3473, %v3437
        %3503 = vst.msk [vmem:[%s258 + $0x74] sm:$0xf] %vm3473, %v3438
        %3504 = vst.msk [vmem:[%s258 + $0x78] sm:$0xf] %vm3473, %v3439
        %3505 = vst.msk [vmem:[%s258 + $0x7c] sm:$0xf] %vm3473, %v3440
        %s3506 = smul.u32 16, %s27
        %p3507 = scmp.lt.s32.totalorder %s26, 1
        %s3508 = scalar_select %p3507, %s26, 1
        %p3509 = scmp.lt.s32.totalorder %s3506, 15
        %s3510 = scalar_select %p3509, %s3506, 15
        %s3511 = smul.addr %s3510, 2
        %s3512 = smul.addr %s3508, 32
        %s3513 = sadd.s32 %s3511, %s3512
        %s3514 = smul.addr %s3513, 4
        %s3515 = scalar_lea.vmem %s2, %s3514
        %s3516 = sand.u32 %s121, 1
        %s3517 = scalar_lea.sflag [#allocation3], %s3516
        %s3518 = sand.u32 %s121, 1
        %s3519 = scalar_lea.vmem [#allocation2], %s3518
        %s3520 = sand.u32 %s149, 1
        %s3521 = scalar_lea.sflag [#allocation5], %s3520
        %s3522 = sand.u32 %s149, 1
        %s3523 = scalar_lea.vmem [#allocation4], %s3522
        // Predicated region
        $region29: #{tpu_custom_call.1} parent=27 // pred_check
          %p3524 = pneg %p103
        $region30: #{tpu_custom_call.1} parent=27 // pred_check_branch
          %3526 = sbr.rel (%p3524) target = $region32
        $region31: #{tpu_custom_call.1} parent=27 // pred_region
          %s3527 = smul.u32 16, %s27
        $region32: #{tpu_custom_call.1} parent=27 // pred_fallthru
          _
        // Predicated region
        $region33: #{tpu_custom_call.1} parent=27 // pred_check
          %p3528 = pneg %p131
        $region34: #{tpu_custom_call.1} parent=27 // pred_check_branch
          %3530 = sbr.rel (%p3528) target = $region36
        $region35: #{tpu_custom_call.1} parent=27 // pred_region
          %s3532 = ssub.s32 16, 16
          %3533 = vsyncadd %s3517, %s3532
          %s3534 = sadd.s32 %s27, %s26
          %s3535 = smul.addr %s3534, 16
          %s3536 = scalar_lea.hbm %s3, %s3535
          %s3538 = sshll.u32 %s3519, 4
          %s3539 = int_to_ptr.vmem [resolvable:$true] %s3538
          %3541 = dma.vmem_to_hbm [thread:$0]  %s3539, 16, %s3536, %s3517
        $region36: #{tpu_custom_call.1} parent=27 // pred_fallthru
          _
        // Predicated region
        $region37: #{tpu_custom_call.1} parent=27 // pred_check
          %p3542 = pneg %p159
        $region38: #{tpu_custom_call.1} parent=27 // pred_check_branch
          %3544 = sbr.rel (%p3542) target = $region40
        $region39: #{tpu_custom_call.1} parent=27 // pred_region
          %s3546 = ssub.s32 16, 16
          %3547 = vsyncadd %s3521, %s3546
          %s3548 = sadd.s32 %s27, %s26
          %s3549 = smul.addr %s3548, 16
          %s3550 = scalar_lea.hbm %s4, %s3549
          %s3552 = sshll.u32 %s3523, 4
          %s3553 = int_to_ptr.vmem [resolvable:$true] %s3552
          %3555 = dma.vmem_to_hbm [thread:$0]  %s3553, 16, %s3550, %s3521
        $region40: #{tpu_custom_call.1} parent=27 // pred_fallthru
          _
      $region28: #{tpu_custom_call.1} parent=5 // pred_fallthru
        _
      %p3556 = scmp.le.s32.totalorder 2, %s17
      // Predicated region
      $region41: #{tpu_custom_call.1} parent=5 // pred_check
        %p3557 = pneg %p3556
      $region42: #{tpu_custom_call.1} parent=5 // pred_check_branch
        %3559 = sbr.rel (%p3557) target = $region44
      $region43: #{tpu_custom_call.1} parent=5 // pred_region
        %s3560 = ssub.s32 %s17, 2
        // Predicated region
        $region45: #{tpu_custom_call.1} parent=43 // pred_check
          %p3561 = pneg %p109
        $region46: #{tpu_custom_call.1} parent=43 // pred_check_branch
          %3563 = sbr.rel (%p3561) target = $region48
        $region47: #{tpu_custom_call.1} parent=43 // pred_region
          %s3564 = smul.u32 16, %s29
          %p3565 = scmp.lt.s32.totalorder %s28, 1
          %s3566 = scalar_select %p3565, %s28, 1
          %p3567 = scmp.lt.s32.totalorder %s3564, 15
          %s3568 = scalar_select %p3567, %s3564, 15
          %s3569 = smul.addr %s3568, 2
          %s3570 = smul.addr %s3566, 32
          %s3571 = sadd.s32 %s3569, %s3570
          %s3572 = smul.addr %s3571, 4
          %s3573 = scalar_lea.vmem %s2, %s3572
        $region48: #{tpu_custom_call.1} parent=43 // pred_fallthru
          _
        // Predicated region
        $region49: #{tpu_custom_call.1} parent=43 // pred_check
          %p3574 = pneg %p137
        $region50: #{tpu_custom_call.1} parent=43 // pred_check_branch
          %3576 = sbr.rel (%p3574) target = $region52
        $region51: #{tpu_custom_call.1} parent=43 // pred_region
          %s3577 = sand.u32 %s122, 1
          %s3578 = scalar_lea.sflag [#allocation3], %s3577
          %s3579 = sand.u32 %s122, 1
          %s3580 = scalar_lea.vmem [#allocation2], %s3579
          %3581 = dma.done %s3578, 16
        $region52: #{tpu_custom_call.1} parent=43 // pred_fallthru
          _
        // Predicated region
        $region53: #{tpu_custom_call.1} parent=43 // pred_check
          %p3582 = pneg %p165
        $region54: #{tpu_custom_call.1} parent=43 // pred_check_branch
          %3584 = sbr.rel (%p3582) target = $region56
        $region55: #{tpu_custom_call.1} parent=43 // pred_region
          %s3585 = sand.u32 %s150, 1
          %s3586 = scalar_lea.sflag [#allocation5], %s3585
          %s3587 = sand.u32 %s150, 1
          %s3588 = scalar_lea.vmem [#allocation4], %s3587
          %3589 = dma.done %s3586, 16
        $region56: #{tpu_custom_call.1} parent=43 // pred_fallthru
          _
      $region44: #{tpu_custom_call.1} parent=5 // pred_fallthru
        _
    $region6: #{tpu_custom_call.1} parent=1 // loop_footer
      %s21 = sadd.s32 1, %s17
    $region7: #{tpu_custom_call.1} parent=1 // loop_footer_branch
      %16 = sbr.rel target = $region3
    $region8: #{tpu_custom_call.1} parent=1 // loop_exit
      _
    %3590 = vsyncpa [#allocation3], 1
    %s3591 = scalar_lea.sflag [#allocation3], 1
    %3592 = vsyncpa %s3591, 1
    %3593 = vsyncpa [#allocation5], 1
    %s3594 = scalar_lea.sflag [#allocation5], 1
    %3595 = vsyncpa %s3594, 1

</llo_original>
